<compile_context>
chip_gen: v7x
topology: tpu7x:2x2x1
jax: 0.10.0
libtpu: 0.0.40
codegen_flags: <defaults>
</compile_context>

<pallas_src>
import jax
import jax.numpy as jnp
from jax.experimental import pallas as pl
from jax.experimental.pallas import tpu as pltpu

IN_FEATURES = 64 * 64   # 4096, fixed by the module
NUM_CLASSES = 10


def _round_up(x, m):
    return ((x + m - 1) // m) * m


def mlp_kernel(x_ref, w1_ref, b1_ref, w2_ref, b2_ref, w3_ref, b3_ref, out_ref):
    # One batch tile, whole network fused: fc1 -> ReLU -> fc2 -> ReLU -> fc3.
    h1 = jnp.dot(x_ref[...], w1_ref[...], preferred_element_type=jnp.float32)
    h1 = jnp.maximum(h1 + b1_ref[...], 0.0)

    h2 = jnp.dot(h1.astype(w2_ref.dtype), w2_ref[...],
                 preferred_element_type=jnp.float32)
    h2 = jnp.maximum(h2 + b2_ref[...], 0.0)

    logits = jnp.dot(h2.astype(w3_ref.dtype), w3_ref[...],
                     preferred_element_type=jnp.float32)
    out_ref[...] = (logits + b3_ref[...]).astype(out_ref.dtype)


def mlp_forward(x_nchw, params, *, block_b=128, compute_dtype=jnp.float32):
    """x_nchw: (B, 1, 64, 64).  Returns (B, 10) float32 logits."""
    w1, b1, w2, b2, w3, b3 = params
    B = x_nchw.shape[0]
    x = x_nchw.reshape(B, IN_FEATURES).astype(jnp.float32)  # same as torch x.view(-1, 64*64)

    H1, H2 = w1.shape[1], w2.shape[1]
    # Lane-dense padded sizes (multiples of 128); zero-padding is semantics-preserving:
    # padded w/b entries are 0, so padded hidden units are ReLU(0)=0 and contribute nothing.
    H1p = _round_up(H1, 128)
    H2p = _round_up(H2, 128)
    Np = _round_up(NUM_CLASSES, 128)

    # Batch tile: multiple of 8 (sublane), capped at block_b (>=128 keeps MXU rows full
    # at real batch sizes; small batches collapse to a single grid step).
    TB = min(block_b, _round_up(B, 8))
    Bp = _round_up(B, TB)

    # Wrapper-side zero padding + (optional) bf16 cast of matmul operands.
    xp = jnp.zeros((Bp, IN_FEATURES), jnp.float32).at[:B].set(x).astype(compute_dtype)
    w1p = jnp.zeros((IN_FEATURES, H1p), jnp.float32).at[:, :H1].set(w1).astype(compute_dtype)
    w2p = jnp.zeros((H1p, H2p), jnp.float32).at[:H1, :H2].set(w2).astype(compute_dtype)
    w3p = jnp.zeros((H2p, Np), jnp.float32).at[:H2, :NUM_CLASSES].set(w3).astype(compute_dtype)
    b1p = jnp.zeros((1, H1p), jnp.float32).at[0, :H1].set(b1)
    b2p = jnp.zeros((1, H2p), jnp.float32).at[0, :H2].set(b2)
    b3p = jnp.zeros((1, Np), jnp.float32).at[0, :NUM_CLASSES].set(b3)

    out_padded = pl.pallas_call(
        mlp_kernel,
        out_shape=jax.ShapeDtypeStruct((Bp, Np), jnp.float32),
        grid_spec=pltpu.PrefetchScalarGridSpec(
            num_scalar_prefetch=0,
            grid=(Bp // TB,),                                   # batch tiles only
            in_specs=[
                pl.BlockSpec((TB, IN_FEATURES), lambda b: (b, 0)),   # x tile (streamed)
                pl.BlockSpec((IN_FEATURES, H1p), lambda b: (0, 0)),  # w1 (resident)
                pl.BlockSpec((1, H1p), lambda b: (0, 0)),            # b1
                pl.BlockSpec((H1p, H2p), lambda b: (0, 0)),          # w2 (resident)
                pl.BlockSpec((1, H2p), lambda b: (0, 0)),            # b2
                pl.BlockSpec((H2p, Np), lambda b: (0, 0)),           # w3 (resident, padded)
                pl.BlockSpec((1, Np), lambda b: (0, 0)),             # b3 (padded)
            ],
            out_specs=pl.BlockSpec((TB, Np), lambda b: (b, 0)),      # lane-dense output
        ),
        compiler_params=pltpu.CompilerParams(
            dimension_semantics=("parallel",),   # batch axis shardable across TCs (v7x)
        ),
    )(xp, w1p, b1p, w2p, b2p, w3p, b3p)

    return out_padded[:B, :NUM_CLASSES]


def init_params(key, hidden_1, hidden_2):
    """Deterministic synthetic init (shapes match nn.Linear in the module)."""
    ks = jax.random.split(key, 6)
    scale1 = 1.0 / jnp.sqrt(IN_FEATURES)
    scale2 = 1.0 / jnp.sqrt(hidden_1)
    scale3 = 1.0 / jnp.sqrt(hidden_2)
    w1 = jax.random.uniform(ks[0], (IN_FEATURES, hidden_1), jnp.float32, -scale1, scale1)
    b1 = jax.random.uniform(ks[1], (hidden_1,), jnp.float32, -scale1, scale1)
    w2 = jax.random.uniform(ks[2], (hidden_1, hidden_2), jnp.float32, -scale2, scale2)
    b2 = jax.random.uniform(ks[3], (hidden_2,), jnp.float32, -scale2, scale2)
    w3 = jax.random.uniform(ks[4], (hidden_2, NUM_CLASSES), jnp.float32, -scale3, scale3)
    b3 = jax.random.uniform(ks[5], (NUM_CLASSES,), jnp.float32, -scale3, scale3)
    return (w1, b1, w2, b2, w3, b3)


if __name__ == "__main__":
    key = jax.random.PRNGKey(0)
    k_x, k_p = jax.random.split(key)

    B, H1, H2 = 8, 128, 64
    x = jax.random.normal(k_x, (B, 1, 64, 64), dtype=jnp.float32)  # NCHW, spatial=64 fixed by module
    params = init_params(k_p, H1, H2)

    # pure-JAX reference
    w1, b1, w2, b2, w3, b3 = params
    xf = x.reshape(B, IN_FEATURES)
    ref = jnp.maximum(xf @ w1 + b1, 0.0)
    ref = jnp.maximum(ref @ w2 + b2, 0.0)
    ref = ref @ w3 + b3

    # f32 path (exact parity with the PyTorch module)
    out_f32 = jax.block_until_ready(mlp_forward(x, params, compute_dtype=jnp.float32))
    assert out_f32.shape == (B, NUM_CLASSES)
    assert jnp.allclose(out_f32, ref, atol=1e-4, rtol=1e-4)

    # bf16 matmul path (v6e/v7x fast path), f32 accumulation — looser tolerance
    out_bf16 = jax.block_until_ready(mlp_forward(x, params, compute_dtype=jnp.bfloat16))
    assert out_bf16.shape == (B, NUM_CLASSES)
    assert jnp.allclose(out_bf16, ref, atol=5e-2, rtol=5e-2)

    print("KERNEL_OK")
</pallas_src>

<mosaic_0001>
module attributes {stable_mosaic.version = 11 : i64} {
  func.func @mlp_kernel(%arg0: i32, %arg1: memref<8x4096xf32, #tpu.memory_space<vmem>>, %arg2: memref<4096x128xf32, #tpu.memory_space<vmem>>, %arg3: memref<1x128xf32, #tpu.memory_space<vmem>>, %arg4: memref<128x128xf32, #tpu.memory_space<vmem>>, %arg5: memref<1x128xf32, #tpu.memory_space<vmem>>, %arg6: memref<128x128xf32, #tpu.memory_space<vmem>>, %arg7: memref<1x128xf32, #tpu.memory_space<vmem>>, %arg8: memref<8x128xf32, #tpu.memory_space<vmem>>) attributes {dimension_semantics = [#tpu.dimension_semantics<parallel>], iteration_bounds = array<i64: 1>, scalar_prefetch = 0 : i64, scratch_operands = 0 : i64, tpu.core_type = #tpu.core_type<tc>, window_params = [{transform_indices = @transform_0, window_bounds = array<i64: 8, 4096>}, {pipeline_mode = #tpu.pipeline_mode<synchronous>, transform_indices = @transform_1, window_bounds = array<i64: 4096, 128>}, {pipeline_mode = #tpu.pipeline_mode<synchronous>, transform_indices = @transform_2, window_bounds = array<i64: 1, 128>}, {pipeline_mode = #tpu.pipeline_mode<synchronous>, transform_indices = @transform_3, window_bounds = array<i64: 128, 128>}, {pipeline_mode = #tpu.pipeline_mode<synchronous>, transform_indices = @transform_4, window_bounds = array<i64: 1, 128>}, {pipeline_mode = #tpu.pipeline_mode<synchronous>, transform_indices = @transform_5, window_bounds = array<i64: 128, 128>}, {pipeline_mode = #tpu.pipeline_mode<synchronous>, transform_indices = @transform_6, window_bounds = array<i64: 1, 128>}, {transform_indices = @transform_7, window_bounds = array<i64: 8, 128>}]} {
    %c0 = arith.constant 0 : index
    %c0_0 = arith.constant 0 : index
    %0 = vector.load %arg1[%c0, %c0_0] : memref<8x4096xf32, #tpu.memory_space<vmem>>, vector<8x4096xf32>
    %c0_1 = arith.constant 0 : index
    %c0_2 = arith.constant 0 : index
    %1 = vector.load %arg2[%c0_1, %c0_2] : memref<4096x128xf32, #tpu.memory_space<vmem>>, vector<4096x128xf32>
    %cst = arith.constant dense<0.000000e+00> : vector<8x128xf32>
    %2 = tpu.matmul %0, %1, %cst {dimension_numbers = #tpu.dot_dimension_numbers<[1], [0], [0], [1], [0, 0, 1, 1], [], []>} : vector<8x4096xf32>, vector<4096x128xf32>, vector<8x128xf32> -> vector<8x128xf32>
    %c0_3 = arith.constant 0 : index
    %c0_4 = arith.constant 0 : index
    %3 = vector.load %arg3[%c0_3, %c0_4] : memref<1x128xf32, #tpu.memory_space<vmem>>, vector<1x128xf32>
    %4 = vector.broadcast %3 : vector<1x128xf32> to vector<8x128xf32>
    %5 = arith.addf %2, %4 : vector<8x128xf32>
    %cst_5 = arith.constant 0.000000e+00 : f32
    %6 = vector.broadcast %cst_5 : f32 to vector<8x128xf32>
    %7 = arith.maximumf %5, %6 : vector<8x128xf32>
    %c0_6 = arith.constant 0 : index
    %c0_7 = arith.constant 0 : index
    %8 = vector.load %arg4[%c0_6, %c0_7] : memref<128x128xf32, #tpu.memory_space<vmem>>, vector<128x128xf32>
    %cst_8 = arith.constant dense<0.000000e+00> : vector<8x128xf32>
    %9 = tpu.matmul %7, %8, %cst_8 {dimension_numbers = #tpu.dot_dimension_numbers<[1], [0], [0], [1], [0, 0, 1, 1], [], []>} : vector<8x128xf32>, vector<128x128xf32>, vector<8x128xf32> -> vector<8x128xf32>
    %c0_9 = arith.constant 0 : index
    %c0_10 = arith.constant 0 : index
    %10 = vector.load %arg5[%c0_9, %c0_10] : memref<1x128xf32, #tpu.memory_space<vmem>>, vector<1x128xf32>
    %11 = vector.broadcast %10 : vector<1x128xf32> to vector<8x128xf32>
    %12 = arith.addf %9, %11 : vector<8x128xf32>
    %cst_11 = arith.constant 0.000000e+00 : f32
    %13 = vector.broadcast %cst_11 : f32 to vector<8x128xf32>
    %14 = arith.maximumf %12, %13 : vector<8x128xf32>
    %c0_12 = arith.constant 0 : index
    %c0_13 = arith.constant 0 : index
    %15 = vector.load %arg6[%c0_12, %c0_13] : memref<128x128xf32, #tpu.memory_space<vmem>>, vector<128x128xf32>
    %cst_14 = arith.constant dense<0.000000e+00> : vector<8x128xf32>
    %16 = tpu.matmul %14, %15, %cst_14 {dimension_numbers = #tpu.dot_dimension_numbers<[1], [0], [0], [1], [0, 0, 1, 1], [], []>} : vector<8x128xf32>, vector<128x128xf32>, vector<8x128xf32> -> vector<8x128xf32>
    %c0_15 = arith.constant 0 : index
    %c0_16 = arith.constant 0 : index
    %17 = vector.load %arg7[%c0_15, %c0_16] : memref<1x128xf32, #tpu.memory_space<vmem>>, vector<1x128xf32>
    %18 = vector.broadcast %17 : vector<1x128xf32> to vector<8x128xf32>
    %19 = arith.addf %16, %18 : vector<8x128xf32>
    %c0_17 = arith.constant 0 : index
    %c0_18 = arith.constant 0 : index
    %20 = vector.load %arg8[%c0_17, %c0_18] : memref<8x128xf32, #tpu.memory_space<vmem>>, vector<8x128xf32>
    tpu.vector_store %arg8[%c0_17, %c0_18], %19 {strides = array<i32>} : memref<8x128xf32, #tpu.memory_space<vmem>>, vector<8x128xf32>,
    return
  }
  func.func @transform_0(%arg0: i32) -> (i32, i32) {
    %c0_i32 = arith.constant 0 : i32
    %c0_i32_0 = arith.constant 0 : i32
    return %arg0, %c0_i32 : i32, i32
  }
  func.func @transform_1(%arg0: i32) -> (i32, i32) {
    %c0_i32 = arith.constant 0 : i32
    %c0_i32_0 = arith.constant 0 : i32
    %c0_i32_1 = arith.constant 0 : i32
    return %c0_i32, %c0_i32_0 : i32, i32
  }
  func.func @transform_2(%arg0: i32) -> (i32, i32) {
    %c0_i32 = arith.constant 0 : i32
    %c0_i32_0 = arith.constant 0 : i32
    %c0_i32_1 = arith.constant 0 : i32
    return %c0_i32, %c0_i32_0 : i32, i32
  }
  func.func @transform_3(%arg0: i32) -> (i32, i32) {
    %c0_i32 = arith.constant 0 : i32
    %c0_i32_0 = arith.constant 0 : i32
    %c0_i32_1 = arith.constant 0 : i32
    return %c0_i32, %c0_i32_0 : i32, i32
  }
  func.func @transform_4(%arg0: i32) -> (i32, i32) {
    %c0_i32 = arith.constant 0 : i32
    %c0_i32_0 = arith.constant 0 : i32
    %c0_i32_1 = arith.constant 0 : i32
    return %c0_i32, %c0_i32_0 : i32, i32
  }
  func.func @transform_5(%arg0: i32) -> (i32, i32) {
    %c0_i32 = arith.constant 0 : i32
    %c0_i32_0 = arith.constant 0 : i32
    %c0_i32_1 = arith.constant 0 : i32
    return %c0_i32, %c0_i32_0 : i32, i32
  }
  func.func @transform_6(%arg0: i32) -> (i32, i32) {
    %c0_i32 = arith.constant 0 : i32
    %c0_i32_0 = arith.constant 0 : i32
    %c0_i32_1 = arith.constant 0 : i32
    return %c0_i32, %c0_i32_0 : i32, i32
  }
  func.func @transform_7(%arg0: i32) -> (i32, i32) {
    %c0_i32 = arith.constant 0 : i32
    %c0_i32_0 = arith.constant 0 : i32
    return %arg0, %c0_i32 : i32, i32
  }
}

</mosaic_0001>

<llo_original>
// kernel: tpu_custom_call.1
$region0: #{tpu_custom_call.1}
  #allocation0 [shape = 'u32[]', space=smem, size = 0x4, offset = 0x4, fixed_abs, tag = 'smem constant byte address 0x4 - core index']
  #allocation1 [shape = 'u32[144,128]{1,0:T(1,128)}', space=vmem, size = 0x12000, scoped, tag = 'internal scratch']
  %s0 = inlined_call_operand.hbm [shape: f32[8,4096], index: 0, kind: input, shape index: {}]
  %s1 = inlined_call_operand.hbm [shape: f32[4096,128], index: 1, kind: input, shape index: {}]
  %s2 = inlined_call_operand.hbm [shape: f32[1,128], index: 2, kind: input, shape index: {}]
  %s3 = inlined_call_operand.hbm [shape: f32[128,128], index: 3, kind: input, shape index: {}]
  %s4 = inlined_call_operand.hbm [shape: f32[1,128], index: 4, kind: input, shape index: {}]
  %s5 = inlined_call_operand.hbm [shape: f32[128,128], index: 5, kind: input, shape index: {}]
  %s6 = inlined_call_operand.hbm [shape: f32[1,128], index: 6, kind: input, shape index: {}]
  %s7 = inlined_call_operand.hbm [shape: f32[8,128], index: 7, kind: output, shape index: {}]
  %s8 = sld [smem:[#allocation0]]
  $region66: #{tpu_custom_call.1} parent=0
    _
  %s10 = ssub.s32 1, %s8
  %s11 = scalar_select 0, %s10, %s8
  $region1: #{tpu_custom_call.1} parent=0
    #allocation2 [shape = 'u8[131072]{0}', space=vmem, size = 0x20000, scoped, tag = 'input window, operand 0, single buffered']
    #allocation3 [shape = 's32[1]{0}', space=sflag, size = 0x4, scoped, tag = 'scoped memory for tpu_custom_call.1']
    #allocation4 [shape = 's32[1]{0}', space=sflag, size = 0x4, scoped, tag = 'scoped memory for tpu_custom_call.1']
    #allocation5 [shape = 'u8[2097152]{0}', space=vmem, size = 0x200000, scoped, tag = 'input window, operand 1, single buffered']
    #allocation6 [shape = 's32[1]{0}', space=sflag, size = 0x4, scoped, tag = 'scoped memory for tpu_custom_call.1']
    #allocation7 [shape = 'u8[512]{0}', space=vmem, size = 0x400, scoped, tag = 'input window, operand 2, single buffered']
    #allocation8 [shape = 'u8[65536]{0}', space=vmem, size = 0x10000, scoped, tag = 'input window, operand 3, single buffered']
    #allocation9 [shape = 's32[1]{0}', space=sflag, size = 0x4, scoped, tag = 'scoped memory for tpu_custom_call.1']
    #allocation10 [shape = 'u8[512]{0}', space=vmem, size = 0x400, scoped, tag = 'input window, operand 4, single buffered']
    #allocation11 [shape = 'u8[65536]{0}', space=vmem, size = 0x10000, scoped, tag = 'input window, operand 5, single buffered']
    #allocation12 [shape = 's32[1]{0}', space=sflag, size = 0x4, scoped, tag = 'scoped memory for tpu_custom_call.1']
    #allocation13 [shape = 'u8[512]{0}', space=vmem, size = 0x400, scoped, tag = 'input window, operand 6, single buffered']
    #allocation14 [shape = 'u8[4096]{0}', space=vmem, size = 0x1000, scoped, tag = 'output window, operand 0, single buffered']
    %12 = vsyncpa [#allocation3], 0
    %13 = vsyncpa [#allocation6], 0
    %14 = vsyncpa [#allocation9], 0
    %15 = vsyncpa [#allocation12], 0
    %16 = vsyncpa [#allocation4], 0
    // Predicated region
    $region2: #{tpu_custom_call.1} parent=1 // pred_check
      _
    $region3: #{tpu_custom_call.1} parent=1 // pred_check_branch
      %18 = sbr.rel (0) target = $region5
    $region4: #{tpu_custom_call.1} parent=1 // pred_region
      %s20 = ssub.s32 4096, 4096
      %21 = vsyncadd [#allocation3], %s20
      %s23 = sshll.u32 [#allocation2], 4
      %s24 = int_to_ptr.vmem [resolvable:$true] %s23
      %26 = dma.hbm_to_vmem [thread:$0]  %s0, 4096, %s24, [#allocation3]
    $region5: #{tpu_custom_call.1} parent=1 // pred_fallthru
      _
    // Predicated region
    $region6: #{tpu_custom_call.1} parent=1 // pred_check
      _
    $region7: #{tpu_custom_call.1} parent=1 // pred_check_branch
      %28 = sbr.rel (0) target = $region9
    $region8: #{tpu_custom_call.1} parent=1 // pred_region
      %s30 = ssub.s32 65536, 65536
      %31 = vsyncadd [#allocation6], %s30
      %s32 = sshll.u32 [#allocation5], 4
      %s33 = int_to_ptr.vmem [resolvable:$true] %s32
      %38 = dma.hbm_to_vmem [thread:$0]  %s1, 65536, %s33, [#allocation6], 128, 128, 8
    $region9: #{tpu_custom_call.1} parent=1 // pred_fallthru
      _
    // Predicated region
    $region10: #{tpu_custom_call.1} parent=1 // pred_check
      _
    $region11: #{tpu_custom_call.1} parent=1 // pred_check_branch
      %40 = sbr.rel (0) target = $region13
    $region12: #{tpu_custom_call.1} parent=1 // pred_region
      %s42 = ssub.s32 16, 16
      %43 = vsyncadd [#allocation6], %s42
      %s45 = sshll.u32 [#allocation7], 4
      %s46 = int_to_ptr.vmem [resolvable:$true] %s45
      %48 = dma.hbm_to_vmem [thread:$0]  %s2, 16, %s46, [#allocation6]
    $region13: #{tpu_custom_call.1} parent=1 // pred_fallthru
      _
    // Predicated region
    $region14: #{tpu_custom_call.1} parent=1 // pred_check
      _
    $region15: #{tpu_custom_call.1} parent=1 // pred_check_branch
      %50 = sbr.rel (0) target = $region17
    $region16: #{tpu_custom_call.1} parent=1 // pred_region
      %s52 = ssub.s32 2048, 2048
      %53 = vsyncadd [#allocation9], %s52
      %s54 = sshll.u32 [#allocation8], 4
      %s55 = int_to_ptr.vmem [resolvable:$true] %s54
      %60 = dma.hbm_to_vmem [thread:$0]  %s3, 2048, %s55, [#allocation9], 128, 128, 8
    $region17: #{tpu_custom_call.1} parent=1 // pred_fallthru
      _
    // Predicated region
    $region18: #{tpu_custom_call.1} parent=1 // pred_check
      _
    $region19: #{tpu_custom_call.1} parent=1 // pred_check_branch
      %62 = sbr.rel (0) target = $region21
    $region20: #{tpu_custom_call.1} parent=1 // pred_region
      %s64 = ssub.s32 16, 16
      %65 = vsyncadd [#allocation9], %s64
      %s67 = sshll.u32 [#allocation10], 4
      %s68 = int_to_ptr.vmem [resolvable:$true] %s67
      %70 = dma.hbm_to_vmem [thread:$0]  %s4, 16, %s68, [#allocation9]
    $region21: #{tpu_custom_call.1} parent=1 // pred_fallthru
      _
    // Predicated region
    $region22: #{tpu_custom_call.1} parent=1 // pred_check
      _
    $region23: #{tpu_custom_call.1} parent=1 // pred_check_branch
      %72 = sbr.rel (0) target = $region25
    $region24: #{tpu_custom_call.1} parent=1 // pred_region
      %s74 = ssub.s32 2048, 2048
      %75 = vsyncadd [#allocation12], %s74
      %s76 = sshll.u32 [#allocation11], 4
      %s77 = int_to_ptr.vmem [resolvable:$true] %s76
      %82 = dma.hbm_to_vmem [thread:$0]  %s5, 2048, %s77, [#allocation12], 128, 128, 8
    $region25: #{tpu_custom_call.1} parent=1 // pred_fallthru
      _
    // Predicated region
    $region26: #{tpu_custom_call.1} parent=1 // pred_check
      _
    $region27: #{tpu_custom_call.1} parent=1 // pred_check_branch
      %84 = sbr.rel (0) target = $region29
    $region28: #{tpu_custom_call.1} parent=1 // pred_region
      %s86 = ssub.s32 16, 16
      %87 = vsyncadd [#allocation12], %s86
      %s89 = sshll.u32 [#allocation13], 4
      %s90 = int_to_ptr.vmem [resolvable:$true] %s89
      %92 = dma.hbm_to_vmem [thread:$0]  %s6, 16, %s90, [#allocation12]
    $region29: #{tpu_custom_call.1} parent=1 // pred_fallthru
      _
    // Predicated region
    $region30: #{tpu_custom_call.1} parent=1 // pred_check
      _
    $region31: #{tpu_custom_call.1} parent=1 // pred_check_branch
      %94 = sbr.rel (0) target = $region33
    $region32: #{tpu_custom_call.1} parent=1 // pred_region
      %95 = dma.done [#allocation3], 4096
    $region33: #{tpu_custom_call.1} parent=1 // pred_fallthru
      _
    // Predicated region
    $region34: #{tpu_custom_call.1} parent=1 // pred_check
      _
    $region35: #{tpu_custom_call.1} parent=1 // pred_check_branch
      %97 = sbr.rel (0) target = $region37
    $region36: #{tpu_custom_call.1} parent=1 // pred_region
      %98 = dma.done [#allocation6], 65536
    $region37: #{tpu_custom_call.1} parent=1 // pred_fallthru
      _
    // Predicated region
    $region38: #{tpu_custom_call.1} parent=1 // pred_check
      _
    $region39: #{tpu_custom_call.1} parent=1 // pred_check_branch
      %100 = sbr.rel (0) target = $region41
    $region40: #{tpu_custom_call.1} parent=1 // pred_region
      %101 = dma.done [#allocation6], 16
    $region41: #{tpu_custom_call.1} parent=1 // pred_fallthru
      _
    // Predicated region
    $region42: #{tpu_custom_call.1} parent=1 // pred_check
      _
    $region43: #{tpu_custom_call.1} parent=1 // pred_check_branch
      %103 = sbr.rel (0) target = $region45
    $region44: #{tpu_custom_call.1} parent=1 // pred_region
      %104 = dma.done [#allocation9], 2048
    $region45: #{tpu_custom_call.1} parent=1 // pred_fallthru
      _
    // Predicated region
    $region46: #{tpu_custom_call.1} parent=1 // pred_check
      _
    $region47: #{tpu_custom_call.1} parent=1 // pred_check_branch
      %106 = sbr.rel (0) target = $region49
    $region48: #{tpu_custom_call.1} parent=1 // pred_region
      %107 = dma.done [#allocation9], 16
    $region49: #{tpu_custom_call.1} parent=1 // pred_fallthru
      _
    // Predicated region
    $region50: #{tpu_custom_call.1} parent=1 // pred_check
      _
    $region51: #{tpu_custom_call.1} parent=1 // pred_check_branch
      %109 = sbr.rel (0) target = $region53
    $region52: #{tpu_custom_call.1} parent=1 // pred_region
      %110 = dma.done [#allocation12], 2048
    $region53: #{tpu_custom_call.1} parent=1 // pred_fallthru
      _
    // Predicated region
    $region54: #{tpu_custom_call.1} parent=1 // pred_check
      _
    $region55: #{tpu_custom_call.1} parent=1 // pred_check_branch
      %112 = sbr.rel (0) target = $region57
    $region56: #{tpu_custom_call.1} parent=1 // pred_region
      %113 = dma.done [#allocation12], 16
    $region57: #{tpu_custom_call.1} parent=1 // pred_fallthru
      _
    %v114 = vld [vmem:[#allocation2] sm:$0xff]
    %v115 = vld [vmem:[#allocation2 + $0x8] sm:$0xff]
    %v116 = vld [vmem:[#allocation2 + $0x10] sm:$0xff]
    %v117 = vld [vmem:[#allocation2 + $0x18] sm:$0xff]
    %v118 = vld [vmem:[#allocation2 + $0x20] sm:$0xff]
    %v119 = vld [vmem:[#allocation2 + $0x28] sm:$0xff]
    %v120 = vld [vmem:[#allocation2 + $0x30] sm:$0xff]
    %v121 = vld [vmem:[#allocation2 + $0x38] sm:$0xff]
    %v122 = vld [vmem:[#allocation2 + $0x40] sm:$0xff]
    %v123 = vld [vmem:[#allocation2 + $0x48] sm:$0xff]
    %v124 = vld [vmem:[#allocation2 + $0x50] sm:$0xff]
    %v125 = vld [vmem:[#allocation2 + $0x58] sm:$0xff]
    %v126 = vld [vmem:[#allocation2 + $0x60] sm:$0xff]
    %v127 = vld [vmem:[#allocation2 + $0x68] sm:$0xff]
    %v128 = vld [vmem:[#allocation2 + $0x70] sm:$0xff]
    %v129 = vld [vmem:[#allocation2 + $0x78] sm:$0xff]
    %v130 = vld [vmem:[#allocation2 + $0x80] sm:$0xff]
    %v131 = vld [vmem:[#allocation2 + $0x88] sm:$0xff]
    %v132 = vld [vmem:[#allocation2 + $0x90] sm:$0xff]
    %v133 = vld [vmem:[#allocation2 + $0x98] sm:$0xff]
    %v134 = vld [vmem:[#allocation2 + $0xa0] sm:$0xff]
    %v135 = vld [vmem:[#allocation2 + $0xa8] sm:$0xff]
    %v136 = vld [vmem:[#allocation2 + $0xb0] sm:$0xff]
    %v137 = vld [vmem:[#allocation2 + $0xb8] sm:$0xff]
    %v138 = vld [vmem:[#allocation2 + $0xc0] sm:$0xff]
    %v139 = vld [vmem:[#allocation2 + $0xc8] sm:$0xff]
    %v140 = vld [vmem:[#allocation2 + $0xd0] sm:$0xff]
    %v141 = vld [vmem:[#allocation2 + $0xd8] sm:$0xff]
    %v142 = vld [vmem:[#allocation2 + $0xe0] sm:$0xff]
    %v143 = vld [vmem:[#allocation2 + $0xe8] sm:$0xff]
    %v144 = vld [vmem:[#allocation2 + $0xf0] sm:$0xff]
    %v145 = vld [vmem:[#allocation2 + $0xf8] sm:$0xff]
    %v146 = vld [vmem:[#allocation5] sm:$0xff]
    %v147 = vld [vmem:[#allocation5 + $0x8] sm:$0xff]
    %v148 = vld [vmem:[#allocation5 + $0x10] sm:$0xff]
    %v149 = vld [vmem:[#allocation5 + $0x18] sm:$0xff]
    %v150 = vld [vmem:[#allocation5 + $0x20] sm:$0xff]
    %v151 = vld [vmem:[#allocation5 + $0x28] sm:$0xff]
    %v152 = vld [vmem:[#allocation5 + $0x30] sm:$0xff]
    %v153 = vld [vmem:[#allocation5 + $0x38] sm:$0xff]
    %v154 = vld [vmem:[#allocation5 + $0x40] sm:$0xff]
    %v155 = vld [vmem:[#allocation5 + $0x48] sm:$0xff]
    %v156 = vld [vmem:[#allocation5 + $0x50] sm:$0xff]
    %v157 = vld [vmem:[#allocation5 + $0x58] sm:$0xff]
    %v158 = vld [vmem:[#allocation5 + $0x60] sm:$0xff]
    %v159 = vld [vmem:[#allocation5 + $0x68] sm:$0xff]
    %v160 = vld [vmem:[#allocation5 + $0x70] sm:$0xff]
    %v161 = vld [vmem:[#allocation5 + $0x78] sm:$0xff]
    %v162 = vld [vmem:[#allocation5 + $0x80] sm:$0xff]
    %v163 = vld [vmem:[#allocation5 + $0x88] sm:$0xff]
    %v164 = vld [vmem:[#allocation5 + $0x90] sm:$0xff]
    %v165 = vld [vmem:[#allocation5 + $0x98] sm:$0xff]
    %v166 = vld [vmem:[#allocation5 + $0xa0] sm:$0xff]
    %v167 = vld [vmem:[#allocation5 + $0xa8] sm:$0xff]
    %v168 = vld [vmem:[#allocation5 + $0xb0] sm:$0xff]
    %v169 = vld [vmem:[#allocation5 + $0xb8] sm:$0xff]
    %v170 = vld [vmem:[#allocation5 + $0xc0] sm:$0xff]
    %v171 = vld [vmem:[#allocation5 + $0xc8] sm:$0xff]
    %v172 = vld [vmem:[#allocation5 + $0xd0] sm:$0xff]
    %v173 = vld [vmem:[#allocation5 + $0xd8] sm:$0xff]
    %v174 = vld [vmem:[#allocation5 + $0xe0] sm:$0xff]
    %v175 = vld [vmem:[#allocation5 + $0xe8] sm:$0xff]
    %v176 = vld [vmem:[#allocation5 + $0xf0] sm:$0xff]
    %v177 = vld [vmem:[#allocation5 + $0xf8] sm:$0xff]
    %v178 = vld [vmem:[#allocation5 + $0x100] sm:$0xff]
    %v179 = vld [vmem:[#allocation5 + $0x108] sm:$0xff]
    %v180 = vld [vmem:[#allocation5 + $0x110] sm:$0xff]
    %v181 = vld [vmem:[#allocation5 + $0x118] sm:$0xff]
    %v182 = vld [vmem:[#allocation5 + $0x120] sm:$0xff]
    %v183 = vld [vmem:[#allocation5 + $0x128] sm:$0xff]
    %v184 = vld [vmem:[#allocation5 + $0x130] sm:$0xff]
    %v185 = vld [vmem:[#allocation5 + $0x138] sm:$0xff]
    %v186 = vld [vmem:[#allocation5 + $0x140] sm:$0xff]
    %v187 = vld [vmem:[#allocation5 + $0x148] sm:$0xff]
    %v188 = vld [vmem:[#allocation5 + $0x150] sm:$0xff]
    %v189 = vld [vmem:[#allocation5 + $0x158] sm:$0xff]
    %v190 = vld [vmem:[#allocation5 + $0x160] sm:$0xff]
    %v191 = vld [vmem:[#allocation5 + $0x168] sm:$0xff]
    %v192 = vld [vmem:[#allocation5 + $0x170] sm:$0xff]
    %v193 = vld [vmem:[#allocation5 + $0x178] sm:$0xff]
    %v194 = vld [vmem:[#allocation5 + $0x180] sm:$0xff]
    %v195 = vld [vmem:[#allocation5 + $0x188] sm:$0xff]
    %v196 = vld [vmem:[#allocation5 + $0x190] sm:$0xff]
    %v197 = vld [vmem:[#allocation5 + $0x198] sm:$0xff]
    %v198 = vld [vmem:[#allocation5 + $0x1a0] sm:$0xff]
    %v199 = vld [vmem:[#allocation5 + $0x1a8] sm:$0xff]
    %v200 = vld [vmem:[#allocation5 + $0x1b0] sm:$0xff]
    %v201 = vld [vmem:[#allocation5 + $0x1b8] sm:$0xff]
    %v202 = vld [vmem:[#allocation5 + $0x1c0] sm:$0xff]
    %v203 = vld [vmem:[#allocation5 + $0x1c8] sm:$0xff]
    %v204 = vld [vmem:[#allocation5 + $0x1d0] sm:$0xff]
    %v205 = vld [vmem:[#allocation5 + $0x1d8] sm:$0xff]
    %v206 = vld [vmem:[#allocation5 + $0x1e0] sm:$0xff]
    %v207 = vld [vmem:[#allocation5 + $0x1e8] sm:$0xff]
    %v208 = vld [vmem:[#allocation5 + $0x1f0] sm:$0xff]
    %v209 = vld [vmem:[#allocation5 + $0x1f8] sm:$0xff]
    %v210 = vld [vmem:[#allocation5 + $0x200] sm:$0xff]
    %v211 = vld [vmem:[#allocation5 + $0x208] sm:$0xff]
    %v212 = vld [vmem:[#allocation5 + $0x210] sm:$0xff]
    %v213 = vld [vmem:[#allocation5 + $0x218] sm:$0xff]
    %v214 = vld [vmem:[#allocation5 + $0x220] sm:$0xff]
    %v215 = vld [vmem:[#allocation5 + $0x228] sm:$0xff]
    %v216 = vld [vmem:[#allocation5 + $0x230] sm:$0xff]
    %v217 = vld [vmem:[#allocation5 + $0x238] sm:$0xff]
    %v218 = vld [vmem:[#allocation5 + $0x240] sm:$0xff]
    %v219 = vld [vmem:[#allocation5 + $0x248] sm:$0xff]
    %v220 = vld [vmem:[#allocation5 + $0x250] sm:$0xff]
    %v221 = vld [vmem:[#allocation5 + $0x258] sm:$0xff]
    %v222 = vld [vmem:[#allocation5 + $0x260] sm:$0xff]
    %v223 = vld [vmem:[#allocation5 + $0x268] sm:$0xff]
    %v224 = vld [vmem:[#allocation5 + $0x270] sm:$0xff]
    %v225 = vld [vmem:[#allocation5 + $0x278] sm:$0xff]
    %v226 = vld [vmem:[#allocation5 + $0x280] sm:$0xff]
    %v227 = vld [vmem:[#allocation5 + $0x288] sm:$0xff]
    %v228 = vld [vmem:[#allocation5 + $0x290] sm:$0xff]
    %v229 = vld [vmem:[#allocation5 + $0x298] sm:$0xff]
    %v230 = vld [vmem:[#allocation5 + $0x2a0] sm:$0xff]
    %v231 = vld [vmem:[#allocation5 + $0x2a8] sm:$0xff]
    %v232 = vld [vmem:[#allocation5 + $0x2b0] sm:$0xff]
    %v233 = vld [vmem:[#allocation5 + $0x2b8] sm:$0xff]
    %v234 = vld [vmem:[#allocation5 + $0x2c0] sm:$0xff]
    %v235 = vld [vmem:[#allocation5 + $0x2c8] sm:$0xff]
    %v236 = vld [vmem:[#allocation5 + $0x2d0] sm:$0xff]
    %v237 = vld [vmem:[#allocation5 + $0x2d8] sm:$0xff]
    %v238 = vld [vmem:[#allocation5 + $0x2e0] sm:$0xff]
    %v239 = vld [vmem:[#allocation5 + $0x2e8] sm:$0xff]
    %v240 = vld [vmem:[#allocation5 + $0x2f0] sm:$0xff]
    %v241 = vld [vmem:[#allocation5 + $0x2f8] sm:$0xff]
    %v242 = vld [vmem:[#allocation5 + $0x300] sm:$0xff]
    %v243 = vld [vmem:[#allocation5 + $0x308] sm:$0xff]
    %v244 = vld [vmem:[#allocation5 + $0x310] sm:$0xff]
    %v245 = vld [vmem:[#allocation5 + $0x318] sm:$0xff]
    %v246 = vld [vmem:[#allocation5 + $0x320] sm:$0xff]
    %v247 = vld [vmem:[#allocation5 + $0x328] sm:$0xff]
    %v248 = vld [vmem:[#allocation5 + $0x330] sm:$0xff]
    %v249 = vld [vmem:[#allocation5 + $0x338] sm:$0xff]
    %v250 = vld [vmem:[#allocation5 + $0x340] sm:$0xff]
    %v251 = vld [vmem:[#allocation5 + $0x348] sm:$0xff]
    %v252 = vld [vmem:[#allocation5 + $0x350] sm:$0xff]
    %v253 = vld [vmem:[#allocation5 + $0x358] sm:$0xff]
    %v254 = vld [vmem:[#allocation5 + $0x360] sm:$0xff]
    %v255 = vld [vmem:[#allocation5 + $0x368] sm:$0xff]
    %v256 = vld [vmem:[#allocation5 + $0x370] sm:$0xff]
    %v257 = vld [vmem:[#allocation5 + $0x378] sm:$0xff]
    %v258 = vld [vmem:[#allocation5 + $0x380] sm:$0xff]
    %v259 = vld [vmem:[#allocation5 + $0x388] sm:$0xff]
    %v260 = vld [vmem:[#allocation5 + $0x390] sm:$0xff]
    %v261 = vld [vmem:[#allocation5 + $0x398] sm:$0xff]
    %v262 = vld [vmem:[#allocation5 + $0x3a0] sm:$0xff]
    %v263 = vld [vmem:[#allocation5 + $0x3a8] sm:$0xff]
    %v264 = vld [vmem:[#allocation5 + $0x3b0] sm:$0xff]
    %v265 = vld [vmem:[#allocation5 + $0x3b8] sm:$0xff]
    %v266 = vld [vmem:[#allocation5 + $0x3c0] sm:$0xff]
    %v267 = vld [vmem:[#allocation5 + $0x3c8] sm:$0xff]
    %v268 = vld [vmem:[#allocation5 + $0x3d0] sm:$0xff]
    %v269 = vld [vmem:[#allocation5 + $0x3d8] sm:$0xff]
    %v270 = vld [vmem:[#allocation5 + $0x3e0] sm:$0xff]
    %v271 = vld [vmem:[#allocation5 + $0x3e8] sm:$0xff]
    %v272 = vld [vmem:[#allocation5 + $0x3f0] sm:$0xff]
    %v273 = vld [vmem:[#allocation5 + $0x3f8] sm:$0xff]
    %v274 = vld [vmem:[#allocation5 + $0x400] sm:$0xff]
    %v275 = vld [vmem:[#allocation5 + $0x408] sm:$0xff]
    %v276 = vld [vmem:[#allocation5 + $0x410] sm:$0xff]
    %v277 = vld [vmem:[#allocation5 + $0x418] sm:$0xff]
    %v278 = vld [vmem:[#allocation5 + $0x420] sm:$0xff]
    %v279 = vld [vmem:[#allocation5 + $0x428] sm:$0xff]
    %v280 = vld [vmem:[#allocation5 + $0x430] sm:$0xff]
    %v281 = vld [vmem:[#allocation5 + $0x438] sm:$0xff]
    %v282 = vld [vmem:[#allocation5 + $0x440] sm:$0xff]
    %v283 = vld [vmem:[#allocation5 + $0x448] sm:$0xff]
    %v284 = vld [vmem:[#allocation5 + $0x450] sm:$0xff]
    %v285 = vld [vmem:[#allocation5 + $0x458] sm:$0xff]
    %v286 = vld [vmem:[#allocation5 + $0x460] sm:$0xff]
    %v287 = vld [vmem:[#allocation5 + $0x468] sm:$0xff]
    %v288 = vld [vmem:[#allocation5 + $0x470] sm:$0xff]
    %v289 = vld [vmem:[#allocation5 + $0x478] sm:$0xff]
    %v290 = vld [vmem:[#allocation5 + $0x480] sm:$0xff]
    %v291 = vld [vmem:[#allocation5 + $0x488] sm:$0xff]
    %v292 = vld [vmem:[#allocation5 + $0x490] sm:$0xff]
    %v293 = vld [vmem:[#allocation5 + $0x498] sm:$0xff]
    %v294 = vld [vmem:[#allocation5 + $0x4a0] sm:$0xff]
    %v295 = vld [vmem:[#allocation5 + $0x4a8] sm:$0xff]
    %v296 = vld [vmem:[#allocation5 + $0x4b0] sm:$0xff]
    %v297 = vld [vmem:[#allocation5 + $0x4b8] sm:$0xff]
    %v298 = vld [vmem:[#allocation5 + $0x4c0] sm:$0xff]
    %v299 = vld [vmem:[#allocation5 + $0x4c8] sm:$0xff]
    %v300 = vld [vmem:[#allocation5 + $0x4d0] sm:$0xff]
    %v301 = vld [vmem:[#allocation5 + $0x4d8] sm:$0xff]
    %v302 = vld [vmem:[#allocation5 + $0x4e0] sm:$0xff]
    %v303 = vld [vmem:[#allocation5 + $0x4e8] sm:$0xff]
    %v304 = vld [vmem:[#allocation5 + $0x4f0] sm:$0xff]
    %v305 = vld [vmem:[#allocation5 + $0x4f8] sm:$0xff]
    %v306 = vld [vmem:[#allocation5 + $0x500] sm:$0xff]
    %v307 = vld [vmem:[#allocation5 + $0x508] sm:$0xff]
    %v308 = vld [vmem:[#allocation5 + $0x510] sm:$0xff]
    %v309 = vld [vmem:[#allocation5 + $0x518] sm:$0xff]
    %v310 = vld [vmem:[#allocation5 + $0x520] sm:$0xff]
    %v311 = vld [vmem:[#allocation5 + $0x528] sm:$0xff]
    %v312 = vld [vmem:[#allocation5 + $0x530] sm:$0xff]
    %v313 = vld [vmem:[#allocation5 + $0x538] sm:$0xff]
    %v314 = vld [vmem:[#allocation5 + $0x540] sm:$0xff]
    %v315 = vld [vmem:[#allocation5 + $0x548] sm:$0xff]
    %v316 = vld [vmem:[#allocation5 + $0x550] sm:$0xff]
    %v317 = vld [vmem:[#allocation5 + $0x558] sm:$0xff]
    %v318 = vld [vmem:[#allocation5 + $0x560] sm:$0xff]
    %v319 = vld [vmem:[#allocation5 + $0x568] sm:$0xff]
    %v320 = vld [vmem:[#allocation5 + $0x570] sm:$0xff]
    %v321 = vld [vmem:[#allocation5 + $0x578] sm:$0xff]
    %v322 = vld [vmem:[#allocation5 + $0x580] sm:$0xff]
    %v323 = vld [vmem:[#allocation5 + $0x588] sm:$0xff]
    %v324 = vld [vmem:[#allocation5 + $0x590] sm:$0xff]
    %v325 = vld [vmem:[#allocation5 + $0x598] sm:$0xff]
    %v326 = vld [vmem:[#allocation5 + $0x5a0] sm:$0xff]
    %v327 = vld [vmem:[#allocation5 + $0x5a8] sm:$0xff]
    %v328 = vld [vmem:[#allocation5 + $0x5b0] sm:$0xff]
    %v329 = vld [vmem:[#allocation5 + $0x5b8] sm:$0xff]
    %v330 = vld [vmem:[#allocation5 + $0x5c0] sm:$0xff]
    %v331 = vld [vmem:[#allocation5 + $0x5c8] sm:$0xff]
    %v332 = vld [vmem:[#allocation5 + $0x5d0] sm:$0xff]
    %v333 = vld [vmem:[#allocation5 + $0x5d8] sm:$0xff]
    %v334 = vld [vmem:[#allocation5 + $0x5e0] sm:$0xff]
    %v335 = vld [vmem:[#allocation5 + $0x5e8] sm:$0xff]
    %v336 = vld [vmem:[#allocation5 + $0x5f0] sm:$0xff]
    %v337 = vld [vmem:[#allocation5 + $0x5f8] sm:$0xff]
    %v338 = vld [vmem:[#allocation5 + $0x600] sm:$0xff]
    %v339 = vld [vmem:[#allocation5 + $0x608] sm:$0xff]
    %v340 = vld [vmem:[#allocation5 + $0x610] sm:$0xff]
    %v341 = vld [vmem:[#allocation5 + $0x618] sm:$0xff]
    %v342 = vld [vmem:[#allocation5 + $0x620] sm:$0xff]
    %v343 = vld [vmem:[#allocation5 + $0x628] sm:$0xff]
    %v344 = vld [vmem:[#allocation5 + $0x630] sm:$0xff]
    %v345 = vld [vmem:[#allocation5 + $0x638] sm:$0xff]
    %v346 = vld [vmem:[#allocation5 + $0x640] sm:$0xff]
    %v347 = vld [vmem:[#allocation5 + $0x648] sm:$0xff]
    %v348 = vld [vmem:[#allocation5 + $0x650] sm:$0xff]
    %v349 = vld [vmem:[#allocation5 + $0x658] sm:$0xff]
    %v350 = vld [vmem:[#allocation5 + $0x660] sm:$0xff]
    %v351 = vld [vmem:[#allocation5 + $0x668] sm:$0xff]
    %v352 = vld [vmem:[#allocation5 + $0x670] sm:$0xff]
    %v353 = vld [vmem:[#allocation5 + $0x678] sm:$0xff]
    %v354 = vld [vmem:[#allocation5 + $0x680] sm:$0xff]
    %v355 = vld [vmem:[#allocation5 + $0x688] sm:$0xff]
    %v356 = vld [vmem:[#allocation5 + $0x690] sm:$0xff]
    %v357 = vld [vmem:[#allocation5 + $0x698] sm:$0xff]
    %v358 = vld [vmem:[#allocation5 + $0x6a0] sm:$0xff]
    %v359 = vld [vmem:[#allocation5 + $0x6a8] sm:$0xff]
    %v360 = vld [vmem:[#allocation5 + $0x6b0] sm:$0xff]
    %v361 = vld [vmem:[#allocation5 + $0x6b8] sm:$0xff]
    %v362 = vld [vmem:[#allocation5 + $0x6c0] sm:$0xff]
    %v363 = vld [vmem:[#allocation5 + $0x6c8] sm:$0xff]
    %v364 = vld [vmem:[#allocation5 + $0x6d0] sm:$0xff]
    %v365 = vld [vmem:[#allocation5 + $0x6d8] sm:$0xff]
    %v366 = vld [vmem:[#allocation5 + $0x6e0] sm:$0xff]
    %v367 = vld [vmem:[#allocation5 + $0x6e8] sm:$0xff]
    %v368 = vld [vmem:[#allocation5 + $0x6f0] sm:$0xff]
    %v369 = vld [vmem:[#allocation5 + $0x6f8] sm:$0xff]
    %v370 = vld [vmem:[#allocation5 + $0x700] sm:$0xff]
    %v371 = vld [vmem:[#allocation5 + $0x708] sm:$0xff]
    %v372 = vld [vmem:[#allocation5 + $0x710] sm:$0xff]
    %v373 = vld [vmem:[#allocation5 + $0x718] sm:$0xff]
    %v374 = vld [vmem:[#allocation5 + $0x720] sm:$0xff]
    %v375 = vld [vmem:[#allocation5 + $0x728] sm:$0xff]
    %v376 = vld [vmem:[#allocation5 + $0x730] sm:$0xff]
    %v377 = vld [vmem:[#allocation5 + $0x738] sm:$0xff]
    %v378 = vld [vmem:[#allocation5 + $0x740] sm:$0xff]
    %v379 = vld [vmem:[#allocation5 + $0x748] sm:$0xff]
    %v380 = vld [vmem:[#allocation5 + $0x750] sm:$0xff]
    %v381 = vld [vmem:[#allocation5 + $0x758] sm:$0xff]
    %v382 = vld [vmem:[#allocation5 + $0x760] sm:$0xff]
    %v383 = vld [vmem:[#allocation5 + $0x768] sm:$0xff]
    %v384 = vld [vmem:[#allocation5 + $0x770] sm:$0xff]
    %v385 = vld [vmem:[#allocation5 + $0x778] sm:$0xff]
    %v386 = vld [vmem:[#allocation5 + $0x780] sm:$0xff]
    %v387 = vld [vmem:[#allocation5 + $0x788] sm:$0xff]
    %v388 = vld [vmem:[#allocation5 + $0x790] sm:$0xff]
    %v389 = vld [vmem:[#allocation5 + $0x798] sm:$0xff]
    %v390 = vld [vmem:[#allocation5 + $0x7a0] sm:$0xff]
    %v391 = vld [vmem:[#allocation5 + $0x7a8] sm:$0xff]
    %v392 = vld [vmem:[#allocation5 + $0x7b0] sm:$0xff]
    %v393 = vld [vmem:[#allocation5 + $0x7b8] sm:$0xff]
    %v394 = vld [vmem:[#allocation5 + $0x7c0] sm:$0xff]
    %v395 = vld [vmem:[#allocation5 + $0x7c8] sm:$0xff]
    %v396 = vld [vmem:[#allocation5 + $0x7d0] sm:$0xff]
    %v397 = vld [vmem:[#allocation5 + $0x7d8] sm:$0xff]
    %v398 = vld [vmem:[#allocation5 + $0x7e0] sm:$0xff]
    %v399 = vld [vmem:[#allocation5 + $0x7e8] sm:$0xff]
    %v400 = vld [vmem:[#allocation5 + $0x7f0] sm:$0xff]
    %v401 = vld [vmem:[#allocation5 + $0x7f8] sm:$0xff]
    %v402 = vld [vmem:[#allocation5 + $0x800] sm:$0xff]
    %v403 = vld [vmem:[#allocation5 + $0x808] sm:$0xff]
    %v404 = vld [vmem:[#allocation5 + $0x810] sm:$0xff]
    %v405 = vld [vmem:[#allocation5 + $0x818] sm:$0xff]
    %v406 = vld [vmem:[#allocation5 + $0x820] sm:$0xff]
    %v407 = vld [vmem:[#allocation5 + $0x828] sm:$0xff]
    %v408 = vld [vmem:[#allocation5 + $0x830] sm:$0xff]
    %v409 = vld [vmem:[#allocation5 + $0x838] sm:$0xff]
    %v410 = vld [vmem:[#allocation5 + $0x840] sm:$0xff]
    %v411 = vld [vmem:[#allocation5 + $0x848] sm:$0xff]
    %v412 = vld [vmem:[#allocation5 + $0x850] sm:$0xff]
    %v413 = vld [vmem:[#allocation5 + $0x858] sm:$0xff]
    %v414 = vld [vmem:[#allocation5 + $0x860] sm:$0xff]
    %v415 = vld [vmem:[#allocation5 + $0x868] sm:$0xff]
    %v416 = vld [vmem:[#allocation5 + $0x870] sm:$0xff]
    %v417 = vld [vmem:[#allocation5 + $0x878] sm:$0xff]
    %v418 = vld [vmem:[#allocation5 + $0x880] sm:$0xff]
    %v419 = vld [vmem:[#allocation5 + $0x888] sm:$0xff]
    %v420 = vld [vmem:[#allocation5 + $0x890] sm:$0xff]
    %v421 = vld [vmem:[#allocation5 + $0x898] sm:$0xff]
    %v422 = vld [vmem:[#allocation5 + $0x8a0] sm:$0xff]
    %v423 = vld [vmem:[#allocation5 + $0x8a8] sm:$0xff]
    %v424 = vld [vmem:[#allocation5 + $0x8b0] sm:$0xff]
    %v425 = vld [vmem:[#allocation5 + $0x8b8] sm:$0xff]
    %v426 = vld [vmem:[#allocation5 + $0x8c0] sm:$0xff]
    %v427 = vld [vmem:[#allocation5 + $0x8c8] sm:$0xff]
    %v428 = vld [vmem:[#allocation5 + $0x8d0] sm:$0xff]
    %v429 = vld [vmem:[#allocation5 + $0x8d8] sm:$0xff]
    %v430 = vld [vmem:[#allocation5 + $0x8e0] sm:$0xff]
    %v431 = vld [vmem:[#allocation5 + $0x8e8] sm:$0xff]
    %v432 = vld [vmem:[#allocation5 + $0x8f0] sm:$0xff]
    %v433 = vld [vmem:[#allocation5 + $0x8f8] sm:$0xff]
    %v434 = vld [vmem:[#allocation5 + $0x900] sm:$0xff]
    %v435 = vld [vmem:[#allocation5 + $0x908] sm:$0xff]
    %v436 = vld [vmem:[#allocation5 + $0x910] sm:$0xff]
    %v437 = vld [vmem:[#allocation5 + $0x918] sm:$0xff]
    %v438 = vld [vmem:[#allocation5 + $0x920] sm:$0xff]
    %v439 = vld [vmem:[#allocation5 + $0x928] sm:$0xff]
    %v440 = vld [vmem:[#allocation5 + $0x930] sm:$0xff]
    %v441 = vld [vmem:[#allocation5 + $0x938] sm:$0xff]
    %v442 = vld [vmem:[#allocation5 + $0x940] sm:$0xff]
    %v443 = vld [vmem:[#allocation5 + $0x948] sm:$0xff]
    %v444 = vld [vmem:[#allocation5 + $0x950] sm:$0xff]
    %v445 = vld [vmem:[#allocation5 + $0x958] sm:$0xff]
    %v446 = vld [vmem:[#allocation5 + $0x960] sm:$0xff]
    %v447 = vld [vmem:[#allocation5 + $0x968] sm:$0xff]
    %v448 = vld [vmem:[#allocation5 + $0x970] sm:$0xff]
    %v449 = vld [vmem:[#allocation5 + $0x978] sm:$0xff]
    %v450 = vld [vmem:[#allocation5 + $0x980] sm:$0xff]
    %v451 = vld [vmem:[#allocation5 + $0x988] sm:$0xff]
    %v452 = vld [vmem:[#allocation5 + $0x990] sm:$0xff]
    %v453 = vld [vmem:[#allocation5 + $0x998] sm:$0xff]
    %v454 = vld [vmem:[#allocation5 + $0x9a0] sm:$0xff]
    %v455 = vld [vmem:[#allocation5 + $0x9a8] sm:$0xff]
    %v456 = vld [vmem:[#allocation5 + $0x9b0] sm:$0xff]
    %v457 = vld [vmem:[#allocation5 + $0x9b8] sm:$0xff]
    %v458 = vld [vmem:[#allocation5 + $0x9c0] sm:$0xff]
    %v459 = vld [vmem:[#allocation5 + $0x9c8] sm:$0xff]
    %v460 = vld [vmem:[#allocation5 + $0x9d0] sm:$0xff]
    %v461 = vld [vmem:[#allocation5 + $0x9d8] sm:$0xff]
    %v462 = vld [vmem:[#allocation5 + $0x9e0] sm:$0xff]
    %v463 = vld [vmem:[#allocation5 + $0x9e8] sm:$0xff]
    %v464 = vld [vmem:[#allocation5 + $0x9f0] sm:$0xff]
    %v465 = vld [vmem:[#allocation5 + $0x9f8] sm:$0xff]
    %v466 = vld [vmem:[#allocation5 + $0xa00] sm:$0xff]
    %v467 = vld [vmem:[#allocation5 + $0xa08] sm:$0xff]
    %v468 = vld [vmem:[#allocation5 + $0xa10] sm:$0xff]
    %v469 = vld [vmem:[#allocation5 + $0xa18] sm:$0xff]
    %v470 = vld [vmem:[#allocation5 + $0xa20] sm:$0xff]
    %v471 = vld [vmem:[#allocation5 + $0xa28] sm:$0xff]
    %v472 = vld [vmem:[#allocation5 + $0xa30] sm:$0xff]
    %v473 = vld [vmem:[#allocation5 + $0xa38] sm:$0xff]
    %v474 = vld [vmem:[#allocation5 + $0xa40] sm:$0xff]
    %v475 = vld [vmem:[#allocation5 + $0xa48] sm:$0xff]
    %v476 = vld [vmem:[#allocation5 + $0xa50] sm:$0xff]
    %v477 = vld [vmem:[#allocation5 + $0xa58] sm:$0xff]
    %v478 = vld [vmem:[#allocation5 + $0xa60] sm:$0xff]
    %v479 = vld [vmem:[#allocation5 + $0xa68] sm:$0xff]
    %v480 = vld [vmem:[#allocation5 + $0xa70] sm:$0xff]
    %v481 = vld [vmem:[#allocation5 + $0xa78] sm:$0xff]
    %v482 = vld [vmem:[#allocation5 + $0xa80] sm:$0xff]
    %v483 = vld [vmem:[#allocation5 + $0xa88] sm:$0xff]
    %v484 = vld [vmem:[#allocation5 + $0xa90] sm:$0xff]
    %v485 = vld [vmem:[#allocation5 + $0xa98] sm:$0xff]
    %v486 = vld [vmem:[#allocation5 + $0xaa0] sm:$0xff]
    %v487 = vld [vmem:[#allocation5 + $0xaa8] sm:$0xff]
    %v488 = vld [vmem:[#allocation5 + $0xab0] sm:$0xff]
    %v489 = vld [vmem:[#allocation5 + $0xab8] sm:$0xff]
    %v490 = vld [vmem:[#allocation5 + $0xac0] sm:$0xff]
    %v491 = vld [vmem:[#allocation5 + $0xac8] sm:$0xff]
    %v492 = vld [vmem:[#allocation5 + $0xad0] sm:$0xff]
    %v493 = vld [vmem:[#allocation5 + $0xad8] sm:$0xff]
    %v494 = vld [vmem:[#allocation5 + $0xae0] sm:$0xff]
    %v495 = vld [vmem:[#allocation5 + $0xae8] sm:$0xff]
    %v496 = vld [vmem:[#allocation5 + $0xaf0] sm:$0xff]
    %v497 = vld [vmem:[#allocation5 + $0xaf8] sm:$0xff]
    %v498 = vld [vmem:[#allocation5 + $0xb00] sm:$0xff]
    %v499 = vld [vmem:[#allocation5 + $0xb08] sm:$0xff]
    %v500 = vld [vmem:[#allocation5 + $0xb10] sm:$0xff]
    %v501 = vld [vmem:[#allocation5 + $0xb18] sm:$0xff]
    %v502 = vld [vmem:[#allocation5 + $0xb20] sm:$0xff]
    %v503 = vld [vmem:[#allocation5 + $0xb28] sm:$0xff]
    %v504 = vld [vmem:[#allocation5 + $0xb30] sm:$0xff]
    %v505 = vld [vmem:[#allocation5 + $0xb38] sm:$0xff]
    %v506 = vld [vmem:[#allocation5 + $0xb40] sm:$0xff]
    %v507 = vld [vmem:[#allocation5 + $0xb48] sm:$0xff]
    %v508 = vld [vmem:[#allocation5 + $0xb50] sm:$0xff]
    %v509 = vld [vmem:[#allocation5 + $0xb58] sm:$0xff]
    %v510 = vld [vmem:[#allocation5 + $0xb60] sm:$0xff]
    %v511 = vld [vmem:[#allocation5 + $0xb68] sm:$0xff]
    %v512 = vld [vmem:[#allocation5 + $0xb70] sm:$0xff]
    %v513 = vld [vmem:[#allocation5 + $0xb78] sm:$0xff]
    %v514 = vld [vmem:[#allocation5 + $0xb80] sm:$0xff]
    %v515 = vld [vmem:[#allocation5 + $0xb88] sm:$0xff]
    %v516 = vld [vmem:[#allocation5 + $0xb90] sm:$0xff]
    %v517 = vld [vmem:[#allocation5 + $0xb98] sm:$0xff]
    %v518 = vld [vmem:[#allocation5 + $0xba0] sm:$0xff]
    %v519 = vld [vmem:[#allocation5 + $0xba8] sm:$0xff]
    %v520 = vld [vmem:[#allocation5 + $0xbb0] sm:$0xff]
    %v521 = vld [vmem:[#allocation5 + $0xbb8] sm:$0xff]
    %v522 = vld [vmem:[#allocation5 + $0xbc0] sm:$0xff]
    %v523 = vld [vmem:[#allocation5 + $0xbc8] sm:$0xff]
    %v524 = vld [vmem:[#allocation5 + $0xbd0] sm:$0xff]
    %v525 = vld [vmem:[#allocation5 + $0xbd8] sm:$0xff]
    %v526 = vld [vmem:[#allocation5 + $0xbe0] sm:$0xff]
    %v527 = vld [vmem:[#allocation5 + $0xbe8] sm:$0xff]
    %v528 = vld [vmem:[#allocation5 + $0xbf0] sm:$0xff]
    %v529 = vld [vmem:[#allocation5 + $0xbf8] sm:$0xff]
    %v530 = vld [vmem:[#allocation5 + $0xc00] sm:$0xff]
    %v531 = vld [vmem:[#allocation5 + $0xc08] sm:$0xff]
    %v532 = vld [vmem:[#allocation5 + $0xc10] sm:$0xff]
    %v533 = vld [vmem:[#allocation5 + $0xc18] sm:$0xff]
    %v534 = vld [vmem:[#allocation5 + $0xc20] sm:$0xff]
    %v535 = vld [vmem:[#allocation5 + $0xc28] sm:$0xff]
    %v536 = vld [vmem:[#allocation5 + $0xc30] sm:$0xff]
    %v537 = vld [vmem:[#allocation5 + $0xc38] sm:$0xff]
    %v538 = vld [vmem:[#allocation5 + $0xc40] sm:$0xff]
    %v539 = vld [vmem:[#allocation5 + $0xc48] sm:$0xff]
    %v540 = vld [vmem:[#allocation5 + $0xc50] sm:$0xff]
    %v541 = vld [vmem:[#allocation5 + $0xc58] sm:$0xff]
    %v542 = vld [vmem:[#allocation5 + $0xc60] sm:$0xff]
    %v543 = vld [vmem:[#allocation5 + $0xc68] sm:$0xff]
    %v544 = vld [vmem:[#allocation5 + $0xc70] sm:$0xff]
    %v545 = vld [vmem:[#allocation5 + $0xc78] sm:$0xff]
    %v546 = vld [vmem:[#allocation5 + $0xc80] sm:$0xff]
    %v547 = vld [vmem:[#allocation5 + $0xc88] sm:$0xff]
    %v548 = vld [vmem:[#allocation5 + $0xc90] sm:$0xff]
    %v549 = vld [vmem:[#allocation5 + $0xc98] sm:$0xff]
    %v550 = vld [vmem:[#allocation5 + $0xca0] sm:$0xff]
    %v551 = vld [vmem:[#allocation5 + $0xca8] sm:$0xff]
    %v552 = vld [vmem:[#allocation5 + $0xcb0] sm:$0xff]
    %v553 = vld [vmem:[#allocation5 + $0xcb8] sm:$0xff]
    %v554 = vld [vmem:[#allocation5 + $0xcc0] sm:$0xff]
    %v555 = vld [vmem:[#allocation5 + $0xcc8] sm:$0xff]
    %v556 = vld [vmem:[#allocation5 + $0xcd0] sm:$0xff]
    %v557 = vld [vmem:[#allocation5 + $0xcd8] sm:$0xff]
    %v558 = vld [vmem:[#allocation5 + $0xce0] sm:$0xff]
    %v559 = vld [vmem:[#allocation5 + $0xce8] sm:$0xff]
    %v560 = vld [vmem:[#allocation5 + $0xcf0] sm:$0xff]
    %v561 = vld [vmem:[#allocation5 + $0xcf8] sm:$0xff]
    %v562 = vld [vmem:[#allocation5 + $0xd00] sm:$0xff]
    %v563 = vld [vmem:[#allocation5 + $0xd08] sm:$0xff]
    %v564 = vld [vmem:[#allocation5 + $0xd10] sm:$0xff]
    %v565 = vld [vmem:[#allocation5 + $0xd18] sm:$0xff]
    %v566 = vld [vmem:[#allocation5 + $0xd20] sm:$0xff]
    %v567 = vld [vmem:[#allocation5 + $0xd28] sm:$0xff]
    %v568 = vld [vmem:[#allocation5 + $0xd30] sm:$0xff]
    %v569 = vld [vmem:[#allocation5 + $0xd38] sm:$0xff]
    %v570 = vld [vmem:[#allocation5 + $0xd40] sm:$0xff]
    %v571 = vld [vmem:[#allocation5 + $0xd48] sm:$0xff]
    %v572 = vld [vmem:[#allocation5 + $0xd50] sm:$0xff]
    %v573 = vld [vmem:[#allocation5 + $0xd58] sm:$0xff]
    %v574 = vld [vmem:[#allocation5 + $0xd60] sm:$0xff]
    %v575 = vld [vmem:[#allocation5 + $0xd68] sm:$0xff]
    %v576 = vld [vmem:[#allocation5 + $0xd70] sm:$0xff]
    %v577 = vld [vmem:[#allocation5 + $0xd78] sm:$0xff]
    %v578 = vld [vmem:[#allocation5 + $0xd80] sm:$0xff]
    %v579 = vld [vmem:[#allocation5 + $0xd88] sm:$0xff]
    %v580 = vld [vmem:[#allocation5 + $0xd90] sm:$0xff]
    %v581 = vld [vmem:[#allocation5 + $0xd98] sm:$0xff]
    %v582 = vld [vmem:[#allocation5 + $0xda0] sm:$0xff]
    %v583 = vld [vmem:[#allocation5 + $0xda8] sm:$0xff]
    %v584 = vld [vmem:[#allocation5 + $0xdb0] sm:$0xff]
    %v585 = vld [vmem:[#allocation5 + $0xdb8] sm:$0xff]
    %v586 = vld [vmem:[#allocation5 + $0xdc0] sm:$0xff]
    %v587 = vld [vmem:[#allocation5 + $0xdc8] sm:$0xff]
    %v588 = vld [vmem:[#allocation5 + $0xdd0] sm:$0xff]
    %v589 = vld [vmem:[#allocation5 + $0xdd8] sm:$0xff]
    %v590 = vld [vmem:[#allocation5 + $0xde0] sm:$0xff]
    %v591 = vld [vmem:[#allocation5 + $0xde8] sm:$0xff]
    %v592 = vld [vmem:[#allocation5 + $0xdf0] sm:$0xff]
    %v593 = vld [vmem:[#allocation5 + $0xdf8] sm:$0xff]
    %v594 = vld [vmem:[#allocation5 + $0xe00] sm:$0xff]
    %v595 = vld [vmem:[#allocation5 + $0xe08] sm:$0xff]
    %v596 = vld [vmem:[#allocation5 + $0xe10] sm:$0xff]
    %v597 = vld [vmem:[#allocation5 + $0xe18] sm:$0xff]
    %v598 = vld [vmem:[#allocation5 + $0xe20] sm:$0xff]
    %v599 = vld [vmem:[#allocation5 + $0xe28] sm:$0xff]
    %v600 = vld [vmem:[#allocation5 + $0xe30] sm:$0xff]
    %v601 = vld [vmem:[#allocation5 + $0xe38] sm:$0xff]
    %v602 = vld [vmem:[#allocation5 + $0xe40] sm:$0xff]
    %v603 = vld [vmem:[#allocation5 + $0xe48] sm:$0xff]
    %v604 = vld [vmem:[#allocation5 + $0xe50] sm:$0xff]
    %v605 = vld [vmem:[#allocation5 + $0xe58] sm:$0xff]
    %v606 = vld [vmem:[#allocation5 + $0xe60] sm:$0xff]
    %v607 = vld [vmem:[#allocation5 + $0xe68] sm:$0xff]
    %v608 = vld [vmem:[#allocation5 + $0xe70] sm:$0xff]
    %v609 = vld [vmem:[#allocation5 + $0xe78] sm:$0xff]
    %v610 = vld [vmem:[#allocation5 + $0xe80] sm:$0xff]
    %v611 = vld [vmem:[#allocation5 + $0xe88] sm:$0xff]
    %v612 = vld [vmem:[#allocation5 + $0xe90] sm:$0xff]
    %v613 = vld [vmem:[#allocation5 + $0xe98] sm:$0xff]
    %v614 = vld [vmem:[#allocation5 + $0xea0] sm:$0xff]
    %v615 = vld [vmem:[#allocation5 + $0xea8] sm:$0xff]
    %v616 = vld [vmem:[#allocation5 + $0xeb0] sm:$0xff]
    %v617 = vld [vmem:[#allocation5 + $0xeb8] sm:$0xff]
    %v618 = vld [vmem:[#allocation5 + $0xec0] sm:$0xff]
    %v619 = vld [vmem:[#allocation5 + $0xec8] sm:$0xff]
    %v620 = vld [vmem:[#allocation5 + $0xed0] sm:$0xff]
    %v621 = vld [vmem:[#allocation5 + $0xed8] sm:$0xff]
    %v622 = vld [vmem:[#allocation5 + $0xee0] sm:$0xff]
    %v623 = vld [vmem:[#allocation5 + $0xee8] sm:$0xff]
    %v624 = vld [vmem:[#allocation5 + $0xef0] sm:$0xff]
    %v625 = vld [vmem:[#allocation5 + $0xef8] sm:$0xff]
    %v626 = vld [vmem:[#allocation5 + $0xf00] sm:$0xff]
    %v627 = vld [vmem:[#allocation5 + $0xf08] sm:$0xff]
    %v628 = vld [vmem:[#allocation5 + $0xf10] sm:$0xff]
    %v629 = vld [vmem:[#allocation5 + $0xf18] sm:$0xff]
    %v630 = vld [vmem:[#allocation5 + $0xf20] sm:$0xff]
    %v631 = vld [vmem:[#allocation5 + $0xf28] sm:$0xff]
    %v632 = vld [vmem:[#allocation5 + $0xf30] sm:$0xff]
    %v633 = vld [vmem:[#allocation5 + $0xf38] sm:$0xff]
    %v634 = vld [vmem:[#allocation5 + $0xf40] sm:$0xff]
    %v635 = vld [vmem:[#allocation5 + $0xf48] sm:$0xff]
    %v636 = vld [vmem:[#allocation5 + $0xf50] sm:$0xff]
    %v637 = vld [vmem:[#allocation5 + $0xf58] sm:$0xff]
    %v638 = vld [vmem:[#allocation5 + $0xf60] sm:$0xff]
    %v639 = vld [vmem:[#allocation5 + $0xf68] sm:$0xff]
    %v640 = vld [vmem:[#allocation5 + $0xf70] sm:$0xff]
    %v641 = vld [vmem:[#allocation5 + $0xf78] sm:$0xff]
    %v642 = vld [vmem:[#allocation5 + $0xf80] sm:$0xff]
    %v643 = vld [vmem:[#allocation5 + $0xf88] sm:$0xff]
    %v644 = vld [vmem:[#allocation5 + $0xf90] sm:$0xff]
    %v645 = vld [vmem:[#allocation5 + $0xf98] sm:$0xff]
    %v646 = vld [vmem:[#allocation5 + $0xfa0] sm:$0xff]
    %v647 = vld [vmem:[#allocation5 + $0xfa8] sm:$0xff]
    %v648 = vld [vmem:[#allocation5 + $0xfb0] sm:$0xff]
    %v649 = vld [vmem:[#allocation5 + $0xfb8] sm:$0xff]
    %v650 = vld [vmem:[#allocation5 + $0xfc0] sm:$0xff]
    %v651 = vld [vmem:[#allocation5 + $0xfc8] sm:$0xff]
    %v652 = vld [vmem:[#allocation5 + $0xfd0] sm:$0xff]
    %v653 = vld [vmem:[#allocation5 + $0xfd8] sm:$0xff]
    %v654 = vld [vmem:[#allocation5 + $0xfe0] sm:$0xff]
    %v655 = vld [vmem:[#allocation5 + $0xfe8] sm:$0xff]
    %v656 = vld [vmem:[#allocation5 + $0xff0] sm:$0xff]
    %v657 = vld [vmem:[#allocation5 + $0xff8] sm:$0xff]
    %v658 = vld [vmem:[#allocation7] sm:$0x1]
    %v660 = vlaneseq
    %v661 = vshrl.u32 %v660, 7
    %v662 = vsub.s32 0, %v661
    %v663 = vrot.slane %v658, %v662
    %665 = vmatprep.subr.mxu0 0.0
    %666 = vmatpush1.msra.mxu0 %v146
    %667 = vmatprep.subr.mxu0 0.0
    %668 = vmatpush1.msra.mxu0 %v147
    %669 = vmatprep.subr.mxu0 0.0
    %670 = vmatpush1.msra.mxu0 %v148
    %671 = vmatprep.subr.mxu0 0.0
    %672 = vmatpush1.msra.mxu0 %v149
    %673 = vmatprep.subr.mxu0 0.0
    %674 = vmatpush1.msra.mxu0 %v150
    %675 = vmatprep.subr.mxu0 0.0
    %676 = vmatpush1.msra.mxu0 %v151
    %677 = vmatprep.subr.mxu0 0.0
    %678 = vmatpush1.msra.mxu0 %v152
    %679 = vmatprep.subr.mxu0 0.0
    %680 = vmatpush1.msra.mxu0 %v153
    %681 = vmatprep.subr.mxu0 0.0
    %682 = vmatpush1.msra.mxu0 %v154
    %683 = vmatprep.subr.mxu0 0.0
    %684 = vmatpush1.msra.mxu0 %v155
    %685 = vmatprep.subr.mxu0 0.0
    %686 = vmatpush1.msra.mxu0 %v156
    %687 = vmatprep.subr.mxu0 0.0
    %688 = vmatpush1.msra.mxu0 %v157
    %689 = vmatprep.subr.mxu0 0.0
    %690 = vmatpush1.msra.mxu0 %v158
    %691 = vmatprep.subr.mxu0 0.0
    %692 = vmatpush1.msra.mxu0 %v159
    %693 = vmatprep.subr.mxu0 0.0
    %694 = vmatpush1.msra.mxu0 %v160
    %695 = vmatprep.subr.mxu0 0.0
    %696 = vmatpush1.msra.mxu0 %v161
    %697 = vmatprep.subr.mxu0 0.0
    %698 = vmatpush1.msra.mxu0 %v162
    %699 = vmatprep.subr.mxu0 0.0
    %700 = vmatpush1.msra.mxu0 %v163
    %701 = vmatprep.subr.mxu0 0.0
    %702 = vmatpush1.msra.mxu0 %v164
    %703 = vmatprep.subr.mxu0 0.0
    %704 = vmatpush1.msra.mxu0 %v165
    %705 = vmatprep.subr.mxu0 0.0
    %706 = vmatpush1.msra.mxu0 %v166
    %707 = vmatprep.subr.mxu0 0.0
    %708 = vmatpush1.msra.mxu0 %v167
    %709 = vmatprep.subr.mxu0 0.0
    %710 = vmatpush1.msra.mxu0 %v168
    %711 = vmatprep.subr.mxu0 0.0
    %712 = vmatpush1.msra.mxu0 %v169
    %713 = vmatprep.subr.mxu0 0.0
    %714 = vmatpush1.msra.mxu0 %v170
    %715 = vmatprep.subr.mxu0 0.0
    %716 = vmatpush1.msra.mxu0 %v171
    %717 = vmatprep.subr.mxu0 0.0
    %718 = vmatpush1.msra.mxu0 %v172
    %719 = vmatprep.subr.mxu0 0.0
    %720 = vmatpush1.msra.mxu0 %v173
    %721 = vmatprep.subr.mxu0 0.0
    %722 = vmatpush1.msra.mxu0 %v174
    %723 = vmatprep.subr.mxu0 0.0
    %724 = vmatpush1.msra.mxu0 %v175
    %725 = vmatprep.subr.mxu0 0.0
    %726 = vmatpush1.msra.mxu0 %v176
    %727 = vmatprep.subr.mxu0 0.0
    %728 = vmatpush1.msra.mxu0 %v177
    %729 = vmatprep.mubr.f32.mxu0 %v115
    %730 = vmatmul.mubr.f32.gmra.mrb[0].mxu0 %v114
    %v731 = vpop.f32.mrb[0].mxu0
    %v732 = vadd.f32 %v663, %v731
    %v733 = vpop.f32.mrb[0].mxu0
    %734 = vdwg.mxu0
    %735 = vmatprep.subr.mxu0 0.0
    %736 = vmatpush1.msra.mxu0 %v178
    %737 = vmatprep.subr.mxu0 0.0
    %738 = vmatpush1.msra.mxu0 %v179
    %739 = vmatprep.subr.mxu0 0.0
    %740 = vmatpush1.msra.mxu0 %v180
    %741 = vmatprep.subr.mxu0 0.0
    %742 = vmatpush1.msra.mxu0 %v181
    %743 = vmatprep.subr.mxu0 0.0
    %744 = vmatpush1.msra.mxu0 %v182
    %745 = vmatprep.subr.mxu0 0.0
    %746 = vmatpush1.msra.mxu0 %v183
    %747 = vmatprep.subr.mxu0 0.0
    %748 = vmatpush1.msra.mxu0 %v184
    %749 = vmatprep.subr.mxu0 0.0
    %750 = vmatpush1.msra.mxu0 %v185
    %751 = vmatprep.subr.mxu0 0.0
    %752 = vmatpush1.msra.mxu0 %v186
    %753 = vmatprep.subr.mxu0 0.0
    %754 = vmatpush1.msra.mxu0 %v187
    %755 = vmatprep.subr.mxu0 0.0
    %756 = vmatpush1.msra.mxu0 %v188
    %757 = vmatprep.subr.mxu0 0.0
    %758 = vmatpush1.msra.mxu0 %v189
    %759 = vmatprep.subr.mxu0 0.0
    %760 = vmatpush1.msra.mxu0 %v190
    %761 = vmatprep.subr.mxu0 0.0
    %762 = vmatpush1.msra.mxu0 %v191
    %763 = vmatprep.subr.mxu0 0.0
    %764 = vmatpush1.msra.mxu0 %v192
    %765 = vmatprep.subr.mxu0 0.0
    %766 = vmatpush1.msra.mxu0 %v193
    %767 = vmatprep.subr.mxu0 0.0
    %768 = vmatpush1.msra.mxu0 %v194
    %769 = vmatprep.subr.mxu0 0.0
    %770 = vmatpush1.msra.mxu0 %v195
    %771 = vmatprep.subr.mxu0 0.0
    %772 = vmatpush1.msra.mxu0 %v196
    %773 = vmatprep.subr.mxu0 0.0
    %774 = vmatpush1.msra.mxu0 %v197
    %775 = vmatprep.subr.mxu0 0.0
    %776 = vmatpush1.msra.mxu0 %v198
    %777 = vmatprep.subr.mxu0 0.0
    %778 = vmatpush1.msra.mxu0 %v199
    %779 = vmatprep.subr.mxu0 0.0
    %780 = vmatpush1.msra.mxu0 %v200
    %781 = vmatprep.subr.mxu0 0.0
    %782 = vmatpush1.msra.mxu0 %v201
    %783 = vmatprep.subr.mxu0 0.0
    %784 = vmatpush1.msra.mxu0 %v202
    %785 = vmatprep.subr.mxu0 0.0
    %786 = vmatpush1.msra.mxu0 %v203
    %787 = vmatprep.subr.mxu0 0.0
    %788 = vmatpush1.msra.mxu0 %v204
    %789 = vmatprep.subr.mxu0 0.0
    %790 = vmatpush1.msra.mxu0 %v205
    %791 = vmatprep.subr.mxu0 0.0
    %792 = vmatpush1.msra.mxu0 %v206
    %793 = vmatprep.subr.mxu0 0.0
    %794 = vmatpush1.msra.mxu0 %v207
    %795 = vmatprep.subr.mxu0 0.0
    %796 = vmatpush1.msra.mxu0 %v208
    %797 = vmatprep.subr.mxu0 0.0
    %798 = vmatpush1.msra.mxu0 %v209
    %799 = vmatprep.mubr.f32.mxu0 %v117
    %800 = vmatmul.mubr.f32.gmra.mrb[0].mxu0 %v116
    %v801 = vpop.f32.mrb[0].mxu0
    %v802 = vadd.f32 %v732, %v801
    %v803 = vpop.f32.mrb[0].mxu0
    %804 = vdwg.mxu0
    %805 = vmatprep.subr.mxu0 0.0
    %806 = vmatpush1.msra.mxu0 %v210
    %807 = vmatprep.subr.mxu0 0.0
    %808 = vmatpush1.msra.mxu0 %v211
    %809 = vmatprep.subr.mxu0 0.0
    %810 = vmatpush1.msra.mxu0 %v212
    %811 = vmatprep.subr.mxu0 0.0
    %812 = vmatpush1.msra.mxu0 %v213
    %813 = vmatprep.subr.mxu0 0.0
    %814 = vmatpush1.msra.mxu0 %v214
    %815 = vmatprep.subr.mxu0 0.0
    %816 = vmatpush1.msra.mxu0 %v215
    %817 = vmatprep.subr.mxu0 0.0
    %818 = vmatpush1.msra.mxu0 %v216
    %819 = vmatprep.subr.mxu0 0.0
    %820 = vmatpush1.msra.mxu0 %v217
    %821 = vmatprep.subr.mxu0 0.0
    %822 = vmatpush1.msra.mxu0 %v218
    %823 = vmatprep.subr.mxu0 0.0
    %824 = vmatpush1.msra.mxu0 %v219
    %825 = vmatprep.subr.mxu0 0.0
    %826 = vmatpush1.msra.mxu0 %v220
    %827 = vmatprep.subr.mxu0 0.0
    %828 = vmatpush1.msra.mxu0 %v221
    %829 = vmatprep.subr.mxu0 0.0
    %830 = vmatpush1.msra.mxu0 %v222
    %831 = vmatprep.subr.mxu0 0.0
    %832 = vmatpush1.msra.mxu0 %v223
    %833 = vmatprep.subr.mxu0 0.0
    %834 = vmatpush1.msra.mxu0 %v224
    %835 = vmatprep.subr.mxu0 0.0
    %836 = vmatpush1.msra.mxu0 %v225
    %837 = vmatprep.subr.mxu0 0.0
    %838 = vmatpush1.msra.mxu0 %v226
    %839 = vmatprep.subr.mxu0 0.0
    %840 = vmatpush1.msra.mxu0 %v227
    %841 = vmatprep.subr.mxu0 0.0
    %842 = vmatpush1.msra.mxu0 %v228
    %843 = vmatprep.subr.mxu0 0.0
    %844 = vmatpush1.msra.mxu0 %v229
    %845 = vmatprep.subr.mxu0 0.0
    %846 = vmatpush1.msra.mxu0 %v230
    %847 = vmatprep.subr.mxu0 0.0
    %848 = vmatpush1.msra.mxu0 %v231
    %849 = vmatprep.subr.mxu0 0.0
    %850 = vmatpush1.msra.mxu0 %v232
    %851 = vmatprep.subr.mxu0 0.0
    %852 = vmatpush1.msra.mxu0 %v233
    %853 = vmatprep.subr.mxu0 0.0
    %854 = vmatpush1.msra.mxu0 %v234
    %855 = vmatprep.subr.mxu0 0.0
    %856 = vmatpush1.msra.mxu0 %v235
    %857 = vmatprep.subr.mxu0 0.0
    %858 = vmatpush1.msra.mxu0 %v236
    %859 = vmatprep.subr.mxu0 0.0
    %860 = vmatpush1.msra.mxu0 %v237
    %861 = vmatprep.subr.mxu0 0.0
    %862 = vmatpush1.msra.mxu0 %v238
    %863 = vmatprep.subr.mxu0 0.0
    %864 = vmatpush1.msra.mxu0 %v239
    %865 = vmatprep.subr.mxu0 0.0
    %866 = vmatpush1.msra.mxu0 %v240
    %867 = vmatprep.subr.mxu0 0.0
    %868 = vmatpush1.msra.mxu0 %v241
    %869 = vmatprep.mubr.f32.mxu0 %v119
    %870 = vmatmul.mubr.f32.gmra.mrb[0].mxu0 %v118
    %v871 = vpop.f32.mrb[0].mxu0
    %v872 = vadd.f32 %v802, %v871
    %v873 = vpop.f32.mrb[0].mxu0
    %874 = vdwg.mxu0
    %875 = vmatprep.subr.mxu0 0.0
    %876 = vmatpush1.msra.mxu0 %v242
    %877 = vmatprep.subr.mxu0 0.0
    %878 = vmatpush1.msra.mxu0 %v243
    %879 = vmatprep.subr.mxu0 0.0
    %880 = vmatpush1.msra.mxu0 %v244
    %881 = vmatprep.subr.mxu0 0.0
    %882 = vmatpush1.msra.mxu0 %v245
    %883 = vmatprep.subr.mxu0 0.0
    %884 = vmatpush1.msra.mxu0 %v246
    %885 = vmatprep.subr.mxu0 0.0
    %886 = vmatpush1.msra.mxu0 %v247
    %887 = vmatprep.subr.mxu0 0.0
    %888 = vmatpush1.msra.mxu0 %v248
    %889 = vmatprep.subr.mxu0 0.0
    %890 = vmatpush1.msra.mxu0 %v249
    %891 = vmatprep.subr.mxu0 0.0
    %892 = vmatpush1.msra.mxu0 %v250
    %893 = vmatprep.subr.mxu0 0.0
    %894 = vmatpush1.msra.mxu0 %v251
    %895 = vmatprep.subr.mxu0 0.0
    %896 = vmatpush1.msra.mxu0 %v252
    %897 = vmatprep.subr.mxu0 0.0
    %898 = vmatpush1.msra.mxu0 %v253
    %899 = vmatprep.subr.mxu0 0.0
    %900 = vmatpush1.msra.mxu0 %v254
    %901 = vmatprep.subr.mxu0 0.0
    %902 = vmatpush1.msra.mxu0 %v255
    %903 = vmatprep.subr.mxu0 0.0
    %904 = vmatpush1.msra.mxu0 %v256
    %905 = vmatprep.subr.mxu0 0.0
    %906 = vmatpush1.msra.mxu0 %v257
    %907 = vmatprep.subr.mxu0 0.0
    %908 = vmatpush1.msra.mxu0 %v258
    %909 = vmatprep.subr.mxu0 0.0
    %910 = vmatpush1.msra.mxu0 %v259
    %911 = vmatprep.subr.mxu0 0.0
    %912 = vmatpush1.msra.mxu0 %v260
    %913 = vmatprep.subr.mxu0 0.0
    %914 = vmatpush1.msra.mxu0 %v261
    %915 = vmatprep.subr.mxu0 0.0
    %916 = vmatpush1.msra.mxu0 %v262
    %917 = vmatprep.subr.mxu0 0.0
    %918 = vmatpush1.msra.mxu0 %v263
    %919 = vmatprep.subr.mxu0 0.0
    %920 = vmatpush1.msra.mxu0 %v264
    %921 = vmatprep.subr.mxu0 0.0
    %922 = vmatpush1.msra.mxu0 %v265
    %923 = vmatprep.subr.mxu0 0.0
    %924 = vmatpush1.msra.mxu0 %v266
    %925 = vmatprep.subr.mxu0 0.0
    %926 = vmatpush1.msra.mxu0 %v267
    %927 = vmatprep.subr.mxu0 0.0
    %928 = vmatpush1.msra.mxu0 %v268
    %929 = vmatprep.subr.mxu0 0.0
    %930 = vmatpush1.msra.mxu0 %v269
    %931 = vmatprep.subr.mxu0 0.0
    %932 = vmatpush1.msra.mxu0 %v270
    %933 = vmatprep.subr.mxu0 0.0
    %934 = vmatpush1.msra.mxu0 %v271
    %935 = vmatprep.subr.mxu0 0.0
    %936 = vmatpush1.msra.mxu0 %v272
    %937 = vmatprep.subr.mxu0 0.0
    %938 = vmatpush1.msra.mxu0 %v273
    %939 = vmatprep.mubr.f32.mxu0 %v121
    %940 = vmatmul.mubr.f32.gmra.mrb[0].mxu0 %v120
    %v941 = vpop.f32.mrb[0].mxu0
    %v942 = vadd.f32 %v872, %v941
    %v943 = vpop.f32.mrb[0].mxu0
    %944 = vdwg.mxu0
    %945 = vmatprep.subr.mxu0 0.0
    %946 = vmatpush1.msra.mxu0 %v274
    %947 = vmatprep.subr.mxu0 0.0
    %948 = vmatpush1.msra.mxu0 %v275
    %949 = vmatprep.subr.mxu0 0.0
    %950 = vmatpush1.msra.mxu0 %v276
    %951 = vmatprep.subr.mxu0 0.0
    %952 = vmatpush1.msra.mxu0 %v277
    %953 = vmatprep.subr.mxu0 0.0
    %954 = vmatpush1.msra.mxu0 %v278
    %955 = vmatprep.subr.mxu0 0.0
    %956 = vmatpush1.msra.mxu0 %v279
    %957 = vmatprep.subr.mxu0 0.0
    %958 = vmatpush1.msra.mxu0 %v280
    %959 = vmatprep.subr.mxu0 0.0
    %960 = vmatpush1.msra.mxu0 %v281
    %961 = vmatprep.subr.mxu0 0.0
    %962 = vmatpush1.msra.mxu0 %v282
    %963 = vmatprep.subr.mxu0 0.0
    %964 = vmatpush1.msra.mxu0 %v283
    %965 = vmatprep.subr.mxu0 0.0
    %966 = vmatpush1.msra.mxu0 %v284
    %967 = vmatprep.subr.mxu0 0.0
    %968 = vmatpush1.msra.mxu0 %v285
    %969 = vmatprep.subr.mxu0 0.0
    %970 = vmatpush1.msra.mxu0 %v286
    %971 = vmatprep.subr.mxu0 0.0
    %972 = vmatpush1.msra.mxu0 %v287
    %973 = vmatprep.subr.mxu0 0.0
    %974 = vmatpush1.msra.mxu0 %v288
    %975 = vmatprep.subr.mxu0 0.0
    %976 = vmatpush1.msra.mxu0 %v289
    %977 = vmatprep.subr.mxu0 0.0
    %978 = vmatpush1.msra.mxu0 %v290
    %979 = vmatprep.subr.mxu0 0.0
    %980 = vmatpush1.msra.mxu0 %v291
    %981 = vmatprep.subr.mxu0 0.0
    %982 = vmatpush1.msra.mxu0 %v292
    %983 = vmatprep.subr.mxu0 0.0
    %984 = vmatpush1.msra.mxu0 %v293
    %985 = vmatprep.subr.mxu0 0.0
    %986 = vmatpush1.msra.mxu0 %v294
    %987 = vmatprep.subr.mxu0 0.0
    %988 = vmatpush1.msra.mxu0 %v295
    %989 = vmatprep.subr.mxu0 0.0
    %990 = vmatpush1.msra.mxu0 %v296
    %991 = vmatprep.subr.mxu0 0.0
    %992 = vmatpush1.msra.mxu0 %v297
    %993 = vmatprep.subr.mxu0 0.0
    %994 = vmatpush1.msra.mxu0 %v298
    %995 = vmatprep.subr.mxu0 0.0
    %996 = vmatpush1.msra.mxu0 %v299
    %997 = vmatprep.subr.mxu0 0.0
    %998 = vmatpush1.msra.mxu0 %v300
    %999 = vmatprep.subr.mxu0 0.0
    %1000 = vmatpush1.msra.mxu0 %v301
    %1001 = vmatprep.subr.mxu0 0.0
    %1002 = vmatpush1.msra.mxu0 %v302
    %1003 = vmatprep.subr.mxu0 0.0
    %1004 = vmatpush1.msra.mxu0 %v303
    %1005 = vmatprep.subr.mxu0 0.0
    %1006 = vmatpush1.msra.mxu0 %v304
    %1007 = vmatprep.subr.mxu0 0.0
    %1008 = vmatpush1.msra.mxu0 %v305
    %1009 = vmatprep.mubr.f32.mxu0 %v123
    %1010 = vmatmul.mubr.f32.gmra.mrb[0].mxu0 %v122
    %v1011 = vpop.f32.mrb[0].mxu0
    %v1012 = vadd.f32 %v942, %v1011
    %v1013 = vpop.f32.mrb[0].mxu0
    %1014 = vdwg.mxu0
    %1015 = vmatprep.subr.mxu0 0.0
    %1016 = vmatpush1.msra.mxu0 %v306
    %1017 = vmatprep.subr.mxu0 0.0
    %1018 = vmatpush1.msra.mxu0 %v307
    %1019 = vmatprep.subr.mxu0 0.0
    %1020 = vmatpush1.msra.mxu0 %v308
    %1021 = vmatprep.subr.mxu0 0.0
    %1022 = vmatpush1.msra.mxu0 %v309
    %1023 = vmatprep.subr.mxu0 0.0
    %1024 = vmatpush1.msra.mxu0 %v310
    %1025 = vmatprep.subr.mxu0 0.0
    %1026 = vmatpush1.msra.mxu0 %v311
    %1027 = vmatprep.subr.mxu0 0.0
    %1028 = vmatpush1.msra.mxu0 %v312
    %1029 = vmatprep.subr.mxu0 0.0
    %1030 = vmatpush1.msra.mxu0 %v313
    %1031 = vmatprep.subr.mxu0 0.0
    %1032 = vmatpush1.msra.mxu0 %v314
    %1033 = vmatprep.subr.mxu0 0.0
    %1034 = vmatpush1.msra.mxu0 %v315
    %1035 = vmatprep.subr.mxu0 0.0
    %1036 = vmatpush1.msra.mxu0 %v316
    %1037 = vmatprep.subr.mxu0 0.0
    %1038 = vmatpush1.msra.mxu0 %v317
    %1039 = vmatprep.subr.mxu0 0.0
    %1040 = vmatpush1.msra.mxu0 %v318
    %1041 = vmatprep.subr.mxu0 0.0
    %1042 = vmatpush1.msra.mxu0 %v319
    %1043 = vmatprep.subr.mxu0 0.0
    %1044 = vmatpush1.msra.mxu0 %v320
    %1045 = vmatprep.subr.mxu0 0.0
    %1046 = vmatpush1.msra.mxu0 %v321
    %1047 = vmatprep.subr.mxu0 0.0
    %1048 = vmatpush1.msra.mxu0 %v322
    %1049 = vmatprep.subr.mxu0 0.0
    %1050 = vmatpush1.msra.mxu0 %v323
    %1051 = vmatprep.subr.mxu0 0.0
    %1052 = vmatpush1.msra.mxu0 %v324
    %1053 = vmatprep.subr.mxu0 0.0
    %1054 = vmatpush1.msra.mxu0 %v325
    %1055 = vmatprep.subr.mxu0 0.0
    %1056 = vmatpush1.msra.mxu0 %v326
    %1057 = vmatprep.subr.mxu0 0.0
    %1058 = vmatpush1.msra.mxu0 %v327
    %1059 = vmatprep.subr.mxu0 0.0
    %1060 = vmatpush1.msra.mxu0 %v328
    %1061 = vmatprep.subr.mxu0 0.0
    %1062 = vmatpush1.msra.mxu0 %v329
    %1063 = vmatprep.subr.mxu0 0.0
    %1064 = vmatpush1.msra.mxu0 %v330
    %1065 = vmatprep.subr.mxu0 0.0
    %1066 = vmatpush1.msra.mxu0 %v331
    %1067 = vmatprep.subr.mxu0 0.0
    %1068 = vmatpush1.msra.mxu0 %v332
    %1069 = vmatprep.subr.mxu0 0.0
    %1070 = vmatpush1.msra.mxu0 %v333
    %1071 = vmatprep.subr.mxu0 0.0
    %1072 = vmatpush1.msra.mxu0 %v334
    %1073 = vmatprep.subr.mxu0 0.0
    %1074 = vmatpush1.msra.mxu0 %v335
    %1075 = vmatprep.subr.mxu0 0.0
    %1076 = vmatpush1.msra.mxu0 %v336
    %1077 = vmatprep.subr.mxu0 0.0
    %1078 = vmatpush1.msra.mxu0 %v337
    %1079 = vmatprep.mubr.f32.mxu0 %v125
    %1080 = vmatmul.mubr.f32.gmra.mrb[0].mxu0 %v124
    %v1081 = vpop.f32.mrb[0].mxu0
    %v1082 = vadd.f32 %v1012, %v1081
    %v1083 = vpop.f32.mrb[0].mxu0
    %1084 = vdwg.mxu0
    %1085 = vmatprep.subr.mxu0 0.0
    %1086 = vmatpush1.msra.mxu0 %v338
    %1087 = vmatprep.subr.mxu0 0.0
    %1088 = vmatpush1.msra.mxu0 %v339
    %1089 = vmatprep.subr.mxu0 0.0
    %1090 = vmatpush1.msra.mxu0 %v340
    %1091 = vmatprep.subr.mxu0 0.0
    %1092 = vmatpush1.msra.mxu0 %v341
    %1093 = vmatprep.subr.mxu0 0.0
    %1094 = vmatpush1.msra.mxu0 %v342
    %1095 = vmatprep.subr.mxu0 0.0
    %1096 = vmatpush1.msra.mxu0 %v343
    %1097 = vmatprep.subr.mxu0 0.0
    %1098 = vmatpush1.msra.mxu0 %v344
    %1099 = vmatprep.subr.mxu0 0.0
    %1100 = vmatpush1.msra.mxu0 %v345
    %1101 = vmatprep.subr.mxu0 0.0
    %1102 = vmatpush1.msra.mxu0 %v346
    %1103 = vmatprep.subr.mxu0 0.0
    %1104 = vmatpush1.msra.mxu0 %v347
    %1105 = vmatprep.subr.mxu0 0.0
    %1106 = vmatpush1.msra.mxu0 %v348
    %1107 = vmatprep.subr.mxu0 0.0
    %1108 = vmatpush1.msra.mxu0 %v349
    %1109 = vmatprep.subr.mxu0 0.0
    %1110 = vmatpush1.msra.mxu0 %v350
    %1111 = vmatprep.subr.mxu0 0.0
    %1112 = vmatpush1.msra.mxu0 %v351
    %1113 = vmatprep.subr.mxu0 0.0
    %1114 = vmatpush1.msra.mxu0 %v352
    %1115 = vmatprep.subr.mxu0 0.0
    %1116 = vmatpush1.msra.mxu0 %v353
    %1117 = vmatprep.subr.mxu0 0.0
    %1118 = vmatpush1.msra.mxu0 %v354
    %1119 = vmatprep.subr.mxu0 0.0
    %1120 = vmatpush1.msra.mxu0 %v355
    %1121 = vmatprep.subr.mxu0 0.0
    %1122 = vmatpush1.msra.mxu0 %v356
    %1123 = vmatprep.subr.mxu0 0.0
    %1124 = vmatpush1.msra.mxu0 %v357
    %1125 = vmatprep.subr.mxu0 0.0
    %1126 = vmatpush1.msra.mxu0 %v358
    %1127 = vmatprep.subr.mxu0 0.0
    %1128 = vmatpush1.msra.mxu0 %v359
    %1129 = vmatprep.subr.mxu0 0.0
    %1130 = vmatpush1.msra.mxu0 %v360
    %1131 = vmatprep.subr.mxu0 0.0
    %1132 = vmatpush1.msra.mxu0 %v361
    %1133 = vmatprep.subr.mxu0 0.0
    %1134 = vmatpush1.msra.mxu0 %v362
    %1135 = vmatprep.subr.mxu0 0.0
    %1136 = vmatpush1.msra.mxu0 %v363
    %1137 = vmatprep.subr.mxu0 0.0
    %1138 = vmatpush1.msra.mxu0 %v364
    %1139 = vmatprep.subr.mxu0 0.0
    %1140 = vmatpush1.msra.mxu0 %v365
    %1141 = vmatprep.subr.mxu0 0.0
    %1142 = vmatpush1.msra.mxu0 %v366
    %1143 = vmatprep.subr.mxu0 0.0
    %1144 = vmatpush1.msra.mxu0 %v367
    %1145 = vmatprep.subr.mxu0 0.0
    %1146 = vmatpush1.msra.mxu0 %v368
    %1147 = vmatprep.subr.mxu0 0.0
    %1148 = vmatpush1.msra.mxu0 %v369
    %1149 = vmatprep.mubr.f32.mxu0 %v127
    %1150 = vmatmul.mubr.f32.gmra.mrb[0].mxu0 %v126
    %v1151 = vpop.f32.mrb[0].mxu0
    %v1152 = vadd.f32 %v1082, %v1151
    %v1153 = vpop.f32.mrb[0].mxu0
    %1154 = vdwg.mxu0
    %1155 = vmatprep.subr.mxu0 0.0
    %1156 = vmatpush1.msra.mxu0 %v370
    %1157 = vmatprep.subr.mxu0 0.0
    %1158 = vmatpush1.msra.mxu0 %v371
    %1159 = vmatprep.subr.mxu0 0.0
    %1160 = vmatpush1.msra.mxu0 %v372
    %1161 = vmatprep.subr.mxu0 0.0
    %1162 = vmatpush1.msra.mxu0 %v373
    %1163 = vmatprep.subr.mxu0 0.0
    %1164 = vmatpush1.msra.mxu0 %v374
    %1165 = vmatprep.subr.mxu0 0.0
    %1166 = vmatpush1.msra.mxu0 %v375
    %1167 = vmatprep.subr.mxu0 0.0
    %1168 = vmatpush1.msra.mxu0 %v376
    %1169 = vmatprep.subr.mxu0 0.0
    %1170 = vmatpush1.msra.mxu0 %v377
    %1171 = vmatprep.subr.mxu0 0.0
    %1172 = vmatpush1.msra.mxu0 %v378
    %1173 = vmatprep.subr.mxu0 0.0
    %1174 = vmatpush1.msra.mxu0 %v379
    %1175 = vmatprep.subr.mxu0 0.0
    %1176 = vmatpush1.msra.mxu0 %v380
    %1177 = vmatprep.subr.mxu0 0.0
    %1178 = vmatpush1.msra.mxu0 %v381
    %1179 = vmatprep.subr.mxu0 0.0
    %1180 = vmatpush1.msra.mxu0 %v382
    %1181 = vmatprep.subr.mxu0 0.0
    %1182 = vmatpush1.msra.mxu0 %v383
    %1183 = vmatprep.subr.mxu0 0.0
    %1184 = vmatpush1.msra.mxu0 %v384
    %1185 = vmatprep.subr.mxu0 0.0
    %1186 = vmatpush1.msra.mxu0 %v385
    %1187 = vmatprep.subr.mxu0 0.0
    %1188 = vmatpush1.msra.mxu0 %v386
    %1189 = vmatprep.subr.mxu0 0.0
    %1190 = vmatpush1.msra.mxu0 %v387
    %1191 = vmatprep.subr.mxu0 0.0
    %1192 = vmatpush1.msra.mxu0 %v388
    %1193 = vmatprep.subr.mxu0 0.0
    %1194 = vmatpush1.msra.mxu0 %v389
    %1195 = vmatprep.subr.mxu0 0.0
    %1196 = vmatpush1.msra.mxu0 %v390
    %1197 = vmatprep.subr.mxu0 0.0
    %1198 = vmatpush1.msra.mxu0 %v391
    %1199 = vmatprep.subr.mxu0 0.0
    %1200 = vmatpush1.msra.mxu0 %v392
    %1201 = vmatprep.subr.mxu0 0.0
    %1202 = vmatpush1.msra.mxu0 %v393
    %1203 = vmatprep.subr.mxu0 0.0
    %1204 = vmatpush1.msra.mxu0 %v394
    %1205 = vmatprep.subr.mxu0 0.0
    %1206 = vmatpush1.msra.mxu0 %v395
    %1207 = vmatprep.subr.mxu0 0.0
    %1208 = vmatpush1.msra.mxu0 %v396
    %1209 = vmatprep.subr.mxu0 0.0
    %1210 = vmatpush1.msra.mxu0 %v397
    %1211 = vmatprep.subr.mxu0 0.0
    %1212 = vmatpush1.msra.mxu0 %v398
    %1213 = vmatprep.subr.mxu0 0.0
    %1214 = vmatpush1.msra.mxu0 %v399
    %1215 = vmatprep.subr.mxu0 0.0
    %1216 = vmatpush1.msra.mxu0 %v400
    %1217 = vmatprep.subr.mxu0 0.0
    %1218 = vmatpush1.msra.mxu0 %v401
    %1219 = vmatprep.mubr.f32.mxu0 %v129
    %1220 = vmatmul.mubr.f32.gmra.mrb[0].mxu0 %v128
    %v1221 = vpop.f32.mrb[0].mxu0
    %v1222 = vadd.f32 %v1152, %v1221
    %v1223 = vpop.f32.mrb[0].mxu0
    %1224 = vdwg.mxu0
    %1225 = vmatprep.subr.mxu0 0.0
    %1226 = vmatpush1.msra.mxu0 %v402
    %1227 = vmatprep.subr.mxu0 0.0
    %1228 = vmatpush1.msra.mxu0 %v403
    %1229 = vmatprep.subr.mxu0 0.0
    %1230 = vmatpush1.msra.mxu0 %v404
    %1231 = vmatprep.subr.mxu0 0.0
    %1232 = vmatpush1.msra.mxu0 %v405
    %1233 = vmatprep.subr.mxu0 0.0
    %1234 = vmatpush1.msra.mxu0 %v406
    %1235 = vmatprep.subr.mxu0 0.0
    %1236 = vmatpush1.msra.mxu0 %v407
    %1237 = vmatprep.subr.mxu0 0.0
    %1238 = vmatpush1.msra.mxu0 %v408
    %1239 = vmatprep.subr.mxu0 0.0
    %1240 = vmatpush1.msra.mxu0 %v409
    %1241 = vmatprep.subr.mxu0 0.0
    %1242 = vmatpush1.msra.mxu0 %v410
    %1243 = vmatprep.subr.mxu0 0.0
    %1244 = vmatpush1.msra.mxu0 %v411
    %1245 = vmatprep.subr.mxu0 0.0
    %1246 = vmatpush1.msra.mxu0 %v412
    %1247 = vmatprep.subr.mxu0 0.0
    %1248 = vmatpush1.msra.mxu0 %v413
    %1249 = vmatprep.subr.mxu0 0.0
    %1250 = vmatpush1.msra.mxu0 %v414
    %1251 = vmatprep.subr.mxu0 0.0
    %1252 = vmatpush1.msra.mxu0 %v415
    %1253 = vmatprep.subr.mxu0 0.0
    %1254 = vmatpush1.msra.mxu0 %v416
    %1255 = vmatprep.subr.mxu0 0.0
    %1256 = vmatpush1.msra.mxu0 %v417
    %1257 = vmatprep.subr.mxu0 0.0
    %1258 = vmatpush1.msra.mxu0 %v418
    %1259 = vmatprep.subr.mxu0 0.0
    %1260 = vmatpush1.msra.mxu0 %v419
    %1261 = vmatprep.subr.mxu0 0.0
    %1262 = vmatpush1.msra.mxu0 %v420
    %1263 = vmatprep.subr.mxu0 0.0
    %1264 = vmatpush1.msra.mxu0 %v421
    %1265 = vmatprep.subr.mxu0 0.0
    %1266 = vmatpush1.msra.mxu0 %v422
    %1267 = vmatprep.subr.mxu0 0.0
    %1268 = vmatpush1.msra.mxu0 %v423
    %1269 = vmatprep.subr.mxu0 0.0
    %1270 = vmatpush1.msra.mxu0 %v424
    %1271 = vmatprep.subr.mxu0 0.0
    %1272 = vmatpush1.msra.mxu0 %v425
    %1273 = vmatprep.subr.mxu0 0.0
    %1274 = vmatpush1.msra.mxu0 %v426
    %1275 = vmatprep.subr.mxu0 0.0
    %1276 = vmatpush1.msra.mxu0 %v427
    %1277 = vmatprep.subr.mxu0 0.0
    %1278 = vmatpush1.msra.mxu0 %v428
    %1279 = vmatprep.subr.mxu0 0.0
    %1280 = vmatpush1.msra.mxu0 %v429
    %1281 = vmatprep.subr.mxu0 0.0
    %1282 = vmatpush1.msra.mxu0 %v430
    %1283 = vmatprep.subr.mxu0 0.0
    %1284 = vmatpush1.msra.mxu0 %v431
    %1285 = vmatprep.subr.mxu0 0.0
    %1286 = vmatpush1.msra.mxu0 %v432
    %1287 = vmatprep.subr.mxu0 0.0
    %1288 = vmatpush1.msra.mxu0 %v433
    %1289 = vmatprep.mubr.f32.mxu0 %v131
    %1290 = vmatmul.mubr.f32.gmra.mrb[0].mxu0 %v130
    %v1291 = vpop.f32.mrb[0].mxu0
    %v1292 = vadd.f32 %v1222, %v1291
    %v1293 = vpop.f32.mrb[0].mxu0
    %1294 = vdwg.mxu0
    %1295 = vmatprep.subr.mxu0 0.0
    %1296 = vmatpush1.msra.mxu0 %v434
    %1297 = vmatprep.subr.mxu0 0.0
    %1298 = vmatpush1.msra.mxu0 %v435
    %1299 = vmatprep.subr.mxu0 0.0
    %1300 = vmatpush1.msra.mxu0 %v436
    %1301 = vmatprep.subr.mxu0 0.0
    %1302 = vmatpush1.msra.mxu0 %v437
    %1303 = vmatprep.subr.mxu0 0.0
    %1304 = vmatpush1.msra.mxu0 %v438
    %1305 = vmatprep.subr.mxu0 0.0
    %1306 = vmatpush1.msra.mxu0 %v439
    %1307 = vmatprep.subr.mxu0 0.0
    %1308 = vmatpush1.msra.mxu0 %v440
    %1309 = vmatprep.subr.mxu0 0.0
    %1310 = vmatpush1.msra.mxu0 %v441
    %1311 = vmatprep.subr.mxu0 0.0
    %1312 = vmatpush1.msra.mxu0 %v442
    %1313 = vmatprep.subr.mxu0 0.0
    %1314 = vmatpush1.msra.mxu0 %v443
    %1315 = vmatprep.subr.mxu0 0.0
    %1316 = vmatpush1.msra.mxu0 %v444
    %1317 = vmatprep.subr.mxu0 0.0
    %1318 = vmatpush1.msra.mxu0 %v445
    %1319 = vmatprep.subr.mxu0 0.0
    %1320 = vmatpush1.msra.mxu0 %v446
    %1321 = vmatprep.subr.mxu0 0.0
    %1322 = vmatpush1.msra.mxu0 %v447
    %1323 = vmatprep.subr.mxu0 0.0
    %1324 = vmatpush1.msra.mxu0 %v448
    %1325 = vmatprep.subr.mxu0 0.0
    %1326 = vmatpush1.msra.mxu0 %v449
    %1327 = vmatprep.subr.mxu0 0.0
    %1328 = vmatpush1.msra.mxu0 %v450
    %1329 = vmatprep.subr.mxu0 0.0
    %1330 = vmatpush1.msra.mxu0 %v451
    %1331 = vmatprep.subr.mxu0 0.0
    %1332 = vmatpush1.msra.mxu0 %v452
    %1333 = vmatprep.subr.mxu0 0.0
    %1334 = vmatpush1.msra.mxu0 %v453
    %1335 = vmatprep.subr.mxu0 0.0
    %1336 = vmatpush1.msra.mxu0 %v454
    %1337 = vmatprep.subr.mxu0 0.0
    %1338 = vmatpush1.msra.mxu0 %v455
    %1339 = vmatprep.subr.mxu0 0.0
    %1340 = vmatpush1.msra.mxu0 %v456
    %1341 = vmatprep.subr.mxu0 0.0
    %1342 = vmatpush1.msra.mxu0 %v457
    %1343 = vmatprep.subr.mxu0 0.0
    %1344 = vmatpush1.msra.mxu0 %v458
    %1345 = vmatprep.subr.mxu0 0.0
    %1346 = vmatpush1.msra.mxu0 %v459
    %1347 = vmatprep.subr.mxu0 0.0
    %1348 = vmatpush1.msra.mxu0 %v460
    %1349 = vmatprep.subr.mxu0 0.0
    %1350 = vmatpush1.msra.mxu0 %v461
    %1351 = vmatprep.subr.mxu0 0.0
    %1352 = vmatpush1.msra.mxu0 %v462
    %1353 = vmatprep.subr.mxu0 0.0
    %1354 = vmatpush1.msra.mxu0 %v463
    %1355 = vmatprep.subr.mxu0 0.0
    %1356 = vmatpush1.msra.mxu0 %v464
    %1357 = vmatprep.subr.mxu0 0.0
    %1358 = vmatpush1.msra.mxu0 %v465
    %1359 = vmatprep.mubr.f32.mxu0 %v133
    %1360 = vmatmul.mubr.f32.gmra.mrb[0].mxu0 %v132
    %v1361 = vpop.f32.mrb[0].mxu0
    %v1362 = vadd.f32 %v1292, %v1361
    %v1363 = vpop.f32.mrb[0].mxu0
    %1364 = vdwg.mxu0
    %1365 = vmatprep.subr.mxu0 0.0
    %1366 = vmatpush1.msra.mxu0 %v466
    %1367 = vmatprep.subr.mxu0 0.0
    %1368 = vmatpush1.msra.mxu0 %v467
    %1369 = vmatprep.subr.mxu0 0.0
    %1370 = vmatpush1.msra.mxu0 %v468
    %1371 = vmatprep.subr.mxu0 0.0
    %1372 = vmatpush1.msra.mxu0 %v469
    %1373 = vmatprep.subr.mxu0 0.0
    %1374 = vmatpush1.msra.mxu0 %v470
    %1375 = vmatprep.subr.mxu0 0.0
    %1376 = vmatpush1.msra.mxu0 %v471
    %1377 = vmatprep.subr.mxu0 0.0
    %1378 = vmatpush1.msra.mxu0 %v472
    %1379 = vmatprep.subr.mxu0 0.0
    %1380 = vmatpush1.msra.mxu0 %v473
    %1381 = vmatprep.subr.mxu0 0.0
    %1382 = vmatpush1.msra.mxu0 %v474
    %1383 = vmatprep.subr.mxu0 0.0
    %1384 = vmatpush1.msra.mxu0 %v475
    %1385 = vmatprep.subr.mxu0 0.0
    %1386 = vmatpush1.msra.mxu0 %v476
    %1387 = vmatprep.subr.mxu0 0.0
    %1388 = vmatpush1.msra.mxu0 %v477
    %1389 = vmatprep.subr.mxu0 0.0
    %1390 = vmatpush1.msra.mxu0 %v478
    %1391 = vmatprep.subr.mxu0 0.0
    %1392 = vmatpush1.msra.mxu0 %v479
    %1393 = vmatprep.subr.mxu0 0.0
    %1394 = vmatpush1.msra.mxu0 %v480
    %1395 = vmatprep.subr.mxu0 0.0
    %1396 = vmatpush1.msra.mxu0 %v481
    %1397 = vmatprep.subr.mxu0 0.0
    %1398 = vmatpush1.msra.mxu0 %v482
    %1399 = vmatprep.subr.mxu0 0.0
    %1400 = vmatpush1.msra.mxu0 %v483
    %1401 = vmatprep.subr.mxu0 0.0
    %1402 = vmatpush1.msra.mxu0 %v484
    %1403 = vmatprep.subr.mxu0 0.0
    %1404 = vmatpush1.msra.mxu0 %v485
    %1405 = vmatprep.subr.mxu0 0.0
    %1406 = vmatpush1.msra.mxu0 %v486
    %1407 = vmatprep.subr.mxu0 0.0
    %1408 = vmatpush1.msra.mxu0 %v487
    %1409 = vmatprep.subr.mxu0 0.0
    %1410 = vmatpush1.msra.mxu0 %v488
    %1411 = vmatprep.subr.mxu0 0.0
    %1412 = vmatpush1.msra.mxu0 %v489
    %1413 = vmatprep.subr.mxu0 0.0
    %1414 = vmatpush1.msra.mxu0 %v490
    %1415 = vmatprep.subr.mxu0 0.0
    %1416 = vmatpush1.msra.mxu0 %v491
    %1417 = vmatprep.subr.mxu0 0.0
    %1418 = vmatpush1.msra.mxu0 %v492
    %1419 = vmatprep.subr.mxu0 0.0
    %1420 = vmatpush1.msra.mxu0 %v493
    %1421 = vmatprep.subr.mxu0 0.0
    %1422 = vmatpush1.msra.mxu0 %v494
    %1423 = vmatprep.subr.mxu0 0.0
    %1424 = vmatpush1.msra.mxu0 %v495
    %1425 = vmatprep.subr.mxu0 0.0
    %1426 = vmatpush1.msra.mxu0 %v496
    %1427 = vmatprep.subr.mxu0 0.0
    %1428 = vmatpush1.msra.mxu0 %v497
    %1429 = vmatprep.mubr.f32.mxu0 %v135
    %1430 = vmatmul.mubr.f32.gmra.mrb[0].mxu0 %v134
    %v1431 = vpop.f32.mrb[0].mxu0
    %v1432 = vadd.f32 %v1362, %v1431
    %v1433 = vpop.f32.mrb[0].mxu0
    %1434 = vdwg.mxu0
    %1435 = vmatprep.subr.mxu0 0.0
    %1436 = vmatpush1.msra.mxu0 %v498
    %1437 = vmatprep.subr.mxu0 0.0
    %1438 = vmatpush1.msra.mxu0 %v499
    %1439 = vmatprep.subr.mxu0 0.0
    %1440 = vmatpush1.msra.mxu0 %v500
    %1441 = vmatprep.subr.mxu0 0.0
    %1442 = vmatpush1.msra.mxu0 %v501
    %1443 = vmatprep.subr.mxu0 0.0
    %1444 = vmatpush1.msra.mxu0 %v502
    %1445 = vmatprep.subr.mxu0 0.0
    %1446 = vmatpush1.msra.mxu0 %v503
    %1447 = vmatprep.subr.mxu0 0.0
    %1448 = vmatpush1.msra.mxu0 %v504
    %1449 = vmatprep.subr.mxu0 0.0
    %1450 = vmatpush1.msra.mxu0 %v505
    %1451 = vmatprep.subr.mxu0 0.0
    %1452 = vmatpush1.msra.mxu0 %v506
    %1453 = vmatprep.subr.mxu0 0.0
    %1454 = vmatpush1.msra.mxu0 %v507
    %1455 = vmatprep.subr.mxu0 0.0
    %1456 = vmatpush1.msra.mxu0 %v508
    %1457 = vmatprep.subr.mxu0 0.0
    %1458 = vmatpush1.msra.mxu0 %v509
    %1459 = vmatprep.subr.mxu0 0.0
    %1460 = vmatpush1.msra.mxu0 %v510
    %1461 = vmatprep.subr.mxu0 0.0
    %1462 = vmatpush1.msra.mxu0 %v511
    %1463 = vmatprep.subr.mxu0 0.0
    %1464 = vmatpush1.msra.mxu0 %v512
    %1465 = vmatprep.subr.mxu0 0.0
    %1466 = vmatpush1.msra.mxu0 %v513
    %1467 = vmatprep.subr.mxu0 0.0
    %1468 = vmatpush1.msra.mxu0 %v514
    %1469 = vmatprep.subr.mxu0 0.0
    %1470 = vmatpush1.msra.mxu0 %v515
    %1471 = vmatprep.subr.mxu0 0.0
    %1472 = vmatpush1.msra.mxu0 %v516
    %1473 = vmatprep.subr.mxu0 0.0
    %1474 = vmatpush1.msra.mxu0 %v517
    %1475 = vmatprep.subr.mxu0 0.0
    %1476 = vmatpush1.msra.mxu0 %v518
    %1477 = vmatprep.subr.mxu0 0.0
    %1478 = vmatpush1.msra.mxu0 %v519
    %1479 = vmatprep.subr.mxu0 0.0
    %1480 = vmatpush1.msra.mxu0 %v520
    %1481 = vmatprep.subr.mxu0 0.0
    %1482 = vmatpush1.msra.mxu0 %v521
    %1483 = vmatprep.subr.mxu0 0.0
    %1484 = vmatpush1.msra.mxu0 %v522
    %1485 = vmatprep.subr.mxu0 0.0
    %1486 = vmatpush1.msra.mxu0 %v523
    %1487 = vmatprep.subr.mxu0 0.0
    %1488 = vmatpush1.msra.mxu0 %v524
    %1489 = vmatprep.subr.mxu0 0.0
    %1490 = vmatpush1.msra.mxu0 %v525
    %1491 = vmatprep.subr.mxu0 0.0
    %1492 = vmatpush1.msra.mxu0 %v526
    %1493 = vmatprep.subr.mxu0 0.0
    %1494 = vmatpush1.msra.mxu0 %v527
    %1495 = vmatprep.subr.mxu0 0.0
    %1496 = vmatpush1.msra.mxu0 %v528
    %1497 = vmatprep.subr.mxu0 0.0
    %1498 = vmatpush1.msra.mxu0 %v529
    %1499 = vmatprep.mubr.f32.mxu0 %v137
    %1500 = vmatmul.mubr.f32.gmra.mrb[0].mxu0 %v136
    %v1501 = vpop.f32.mrb[0].mxu0
    %v1502 = vadd.f32 %v1432, %v1501
    %v1503 = vpop.f32.mrb[0].mxu0
    %1504 = vdwg.mxu0
    %1505 = vmatprep.subr.mxu0 0.0
    %1506 = vmatpush1.msra.mxu0 %v530
    %1507 = vmatprep.subr.mxu0 0.0
    %1508 = vmatpush1.msra.mxu0 %v531
    %1509 = vmatprep.subr.mxu0 0.0
    %1510 = vmatpush1.msra.mxu0 %v532
    %1511 = vmatprep.subr.mxu0 0.0
    %1512 = vmatpush1.msra.mxu0 %v533
    %1513 = vmatprep.subr.mxu0 0.0
    %1514 = vmatpush1.msra.mxu0 %v534
    %1515 = vmatprep.subr.mxu0 0.0
    %1516 = vmatpush1.msra.mxu0 %v535
    %1517 = vmatprep.subr.mxu0 0.0
    %1518 = vmatpush1.msra.mxu0 %v536
    %1519 = vmatprep.subr.mxu0 0.0
    %1520 = vmatpush1.msra.mxu0 %v537
    %1521 = vmatprep.subr.mxu0 0.0
    %1522 = vmatpush1.msra.mxu0 %v538
    %1523 = vmatprep.subr.mxu0 0.0
    %1524 = vmatpush1.msra.mxu0 %v539
    %1525 = vmatprep.subr.mxu0 0.0
    %1526 = vmatpush1.msra.mxu0 %v540
    %1527 = vmatprep.subr.mxu0 0.0
    %1528 = vmatpush1.msra.mxu0 %v541
    %1529 = vmatprep.subr.mxu0 0.0
    %1530 = vmatpush1.msra.mxu0 %v542
    %1531 = vmatprep.subr.mxu0 0.0
    %1532 = vmatpush1.msra.mxu0 %v543
    %1533 = vmatprep.subr.mxu0 0.0
    %1534 = vmatpush1.msra.mxu0 %v544
    %1535 = vmatprep.subr.mxu0 0.0
    %1536 = vmatpush1.msra.mxu0 %v545
    %1537 = vmatprep.subr.mxu0 0.0
    %1538 = vmatpush1.msra.mxu0 %v546
    %1539 = vmatprep.subr.mxu0 0.0
    %1540 = vmatpush1.msra.mxu0 %v547
    %1541 = vmatprep.subr.mxu0 0.0
    %1542 = vmatpush1.msra.mxu0 %v548
    %1543 = vmatprep.subr.mxu0 0.0
    %1544 = vmatpush1.msra.mxu0 %v549
    %1545 = vmatprep.subr.mxu0 0.0
    %1546 = vmatpush1.msra.mxu0 %v550
    %1547 = vmatprep.subr.mxu0 0.0
    %1548 = vmatpush1.msra.mxu0 %v551
    %1549 = vmatprep.subr.mxu0 0.0
    %1550 = vmatpush1.msra.mxu0 %v552
    %1551 = vmatprep.subr.mxu0 0.0
    %1552 = vmatpush1.msra.mxu0 %v553
    %1553 = vmatprep.subr.mxu0 0.0
    %1554 = vmatpush1.msra.mxu0 %v554
    %1555 = vmatprep.subr.mxu0 0.0
    %1556 = vmatpush1.msra.mxu0 %v555
    %1557 = vmatprep.subr.mxu0 0.0
    %1558 = vmatpush1.msra.mxu0 %v556
    %1559 = vmatprep.subr.mxu0 0.0
    %1560 = vmatpush1.msra.mxu0 %v557
    %1561 = vmatprep.subr.mxu0 0.0
    %1562 = vmatpush1.msra.mxu0 %v558
    %1563 = vmatprep.subr.mxu0 0.0
    %1564 = vmatpush1.msra.mxu0 %v559
    %1565 = vmatprep.subr.mxu0 0.0
    %1566 = vmatpush1.msra.mxu0 %v560
    %1567 = vmatprep.subr.mxu0 0.0
    %1568 = vmatpush1.msra.mxu0 %v561
    %1569 = vmatprep.mubr.f32.mxu0 %v139
    %1570 = vmatmul.mubr.f32.gmra.mrb[0].mxu0 %v138
    %v1571 = vpop.f32.mrb[0].mxu0
    %v1572 = vadd.f32 %v1502, %v1571
    %v1573 = vpop.f32.mrb[0].mxu0
    %1574 = vdwg.mxu0
    %1575 = vmatprep.subr.mxu0 0.0
    %1576 = vmatpush1.msra.mxu0 %v562
    %1577 = vmatprep.subr.mxu0 0.0
    %1578 = vmatpush1.msra.mxu0 %v563
    %1579 = vmatprep.subr.mxu0 0.0
    %1580 = vmatpush1.msra.mxu0 %v564
    %1581 = vmatprep.subr.mxu0 0.0
    %1582 = vmatpush1.msra.mxu0 %v565
    %1583 = vmatprep.subr.mxu0 0.0
    %1584 = vmatpush1.msra.mxu0 %v566
    %1585 = vmatprep.subr.mxu0 0.0
    %1586 = vmatpush1.msra.mxu0 %v567
    %1587 = vmatprep.subr.mxu0 0.0
    %1588 = vmatpush1.msra.mxu0 %v568
    %1589 = vmatprep.subr.mxu0 0.0
    %1590 = vmatpush1.msra.mxu0 %v569
    %1591 = vmatprep.subr.mxu0 0.0
    %1592 = vmatpush1.msra.mxu0 %v570
    %1593 = vmatprep.subr.mxu0 0.0
    %1594 = vmatpush1.msra.mxu0 %v571
    %1595 = vmatprep.subr.mxu0 0.0
    %1596 = vmatpush1.msra.mxu0 %v572
    %1597 = vmatprep.subr.mxu0 0.0
    %1598 = vmatpush1.msra.mxu0 %v573
    %1599 = vmatprep.subr.mxu0 0.0
    %1600 = vmatpush1.msra.mxu0 %v574
    %1601 = vmatprep.subr.mxu0 0.0
    %1602 = vmatpush1.msra.mxu0 %v575
    %1603 = vmatprep.subr.mxu0 0.0
    %1604 = vmatpush1.msra.mxu0 %v576
    %1605 = vmatprep.subr.mxu0 0.0
    %1606 = vmatpush1.msra.mxu0 %v577
    %1607 = vmatprep.subr.mxu0 0.0
    %1608 = vmatpush1.msra.mxu0 %v578
    %1609 = vmatprep.subr.mxu0 0.0
    %1610 = vmatpush1.msra.mxu0 %v579
    %1611 = vmatprep.subr.mxu0 0.0
    %1612 = vmatpush1.msra.mxu0 %v580
    %1613 = vmatprep.subr.mxu0 0.0
    %1614 = vmatpush1.msra.mxu0 %v581
    %1615 = vmatprep.subr.mxu0 0.0
    %1616 = vmatpush1.msra.mxu0 %v582
    %1617 = vmatprep.subr.mxu0 0.0
    %1618 = vmatpush1.msra.mxu0 %v583
    %1619 = vmatprep.subr.mxu0 0.0
    %1620 = vmatpush1.msra.mxu0 %v584
    %1621 = vmatprep.subr.mxu0 0.0
    %1622 = vmatpush1.msra.mxu0 %v585
    %1623 = vmatprep.subr.mxu0 0.0
    %1624 = vmatpush1.msra.mxu0 %v586
    %1625 = vmatprep.subr.mxu0 0.0
    %1626 = vmatpush1.msra.mxu0 %v587
    %1627 = vmatprep.subr.mxu0 0.0
    %1628 = vmatpush1.msra.mxu0 %v588
    %1629 = vmatprep.subr.mxu0 0.0
    %1630 = vmatpush1.msra.mxu0 %v589
    %1631 = vmatprep.subr.mxu0 0.0
    %1632 = vmatpush1.msra.mxu0 %v590
    %1633 = vmatprep.subr.mxu0 0.0
    %1634 = vmatpush1.msra.mxu0 %v591
    %1635 = vmatprep.subr.mxu0 0.0
    %1636 = vmatpush1.msra.mxu0 %v592
    %1637 = vmatprep.subr.mxu0 0.0
    %1638 = vmatpush1.msra.mxu0 %v593
    %1639 = vmatprep.mubr.f32.mxu0 %v141
    %1640 = vmatmul.mubr.f32.gmra.mrb[0].mxu0 %v140
    %v1641 = vpop.f32.mrb[0].mxu0
    %v1642 = vadd.f32 %v1572, %v1641
    %v1643 = vpop.f32.mrb[0].mxu0
    %1644 = vdwg.mxu0
    %1645 = vmatprep.subr.mxu0 0.0
    %1646 = vmatpush1.msra.mxu0 %v594
    %1647 = vmatprep.subr.mxu0 0.0
    %1648 = vmatpush1.msra.mxu0 %v595
    %1649 = vmatprep.subr.mxu0 0.0
    %1650 = vmatpush1.msra.mxu0 %v596
    %1651 = vmatprep.subr.mxu0 0.0
    %1652 = vmatpush1.msra.mxu0 %v597
    %1653 = vmatprep.subr.mxu0 0.0
    %1654 = vmatpush1.msra.mxu0 %v598
    %1655 = vmatprep.subr.mxu0 0.0
    %1656 = vmatpush1.msra.mxu0 %v599
    %1657 = vmatprep.subr.mxu0 0.0
    %1658 = vmatpush1.msra.mxu0 %v600
    %1659 = vmatprep.subr.mxu0 0.0
    %1660 = vmatpush1.msra.mxu0 %v601
    %1661 = vmatprep.subr.mxu0 0.0
    %1662 = vmatpush1.msra.mxu0 %v602
    %1663 = vmatprep.subr.mxu0 0.0
    %1664 = vmatpush1.msra.mxu0 %v603
    %1665 = vmatprep.subr.mxu0 0.0
    %1666 = vmatpush1.msra.mxu0 %v604
    %1667 = vmatprep.subr.mxu0 0.0
    %1668 = vmatpush1.msra.mxu0 %v605
    %1669 = vmatprep.subr.mxu0 0.0
    %1670 = vmatpush1.msra.mxu0 %v606
    %1671 = vmatprep.subr.mxu0 0.0
    %1672 = vmatpush1.msra.mxu0 %v607
    %1673 = vmatprep.subr.mxu0 0.0
    %1674 = vmatpush1.msra.mxu0 %v608
    %1675 = vmatprep.subr.mxu0 0.0
    %1676 = vmatpush1.msra.mxu0 %v609
    %1677 = vmatprep.subr.mxu0 0.0
    %1678 = vmatpush1.msra.mxu0 %v610
    %1679 = vmatprep.subr.mxu0 0.0
    %1680 = vmatpush1.msra.mxu0 %v611
    %1681 = vmatprep.subr.mxu0 0.0
    %1682 = vmatpush1.msra.mxu0 %v612
    %1683 = vmatprep.subr.mxu0 0.0
    %1684 = vmatpush1.msra.mxu0 %v613
    %1685 = vmatprep.subr.mxu0 0.0
    %1686 = vmatpush1.msra.mxu0 %v614
    %1687 = vmatprep.subr.mxu0 0.0
    %1688 = vmatpush1.msra.mxu0 %v615
    %1689 = vmatprep.subr.mxu0 0.0
    %1690 = vmatpush1.msra.mxu0 %v616
    %1691 = vmatprep.subr.mxu0 0.0
    %1692 = vmatpush1.msra.mxu0 %v617
    %1693 = vmatprep.subr.mxu0 0.0
    %1694 = vmatpush1.msra.mxu0 %v618
    %1695 = vmatprep.subr.mxu0 0.0
    %1696 = vmatpush1.msra.mxu0 %v619
    %1697 = vmatprep.subr.mxu0 0.0
    %1698 = vmatpush1.msra.mxu0 %v620
    %1699 = vmatprep.subr.mxu0 0.0
    %1700 = vmatpush1.msra.mxu0 %v621
    %1701 = vmatprep.subr.mxu0 0.0
    %1702 = vmatpush1.msra.mxu0 %v622
    %1703 = vmatprep.subr.mxu0 0.0
    %1704 = vmatpush1.msra.mxu0 %v623
    %1705 = vmatprep.subr.mxu0 0.0
    %1706 = vmatpush1.msra.mxu0 %v624
    %1707 = vmatprep.subr.mxu0 0.0
    %1708 = vmatpush1.msra.mxu0 %v625
    %1709 = vmatprep.mubr.f32.mxu0 %v143
    %1710 = vmatmul.mubr.f32.gmra.mrb[0].mxu0 %v142
    %v1711 = vpop.f32.mrb[0].mxu0
    %v1712 = vadd.f32 %v1642, %v1711
    %v1713 = vpop.f32.mrb[0].mxu0
    %1714 = vdwg.mxu0
    %1715 = vmatprep.subr.mxu0 0.0
    %1716 = vmatpush1.msra.mxu0 %v626
    %1717 = vmatprep.subr.mxu0 0.0
    %1718 = vmatpush1.msra.mxu0 %v627
    %1719 = vmatprep.subr.mxu0 0.0
    %1720 = vmatpush1.msra.mxu0 %v628
    %1721 = vmatprep.subr.mxu0 0.0
    %1722 = vmatpush1.msra.mxu0 %v629
    %1723 = vmatprep.subr.mxu0 0.0
    %1724 = vmatpush1.msra.mxu0 %v630
    %1725 = vmatprep.subr.mxu0 0.0
    %1726 = vmatpush1.msra.mxu0 %v631
    %1727 = vmatprep.subr.mxu0 0.0
    %1728 = vmatpush1.msra.mxu0 %v632
    %1729 = vmatprep.subr.mxu0 0.0
    %1730 = vmatpush1.msra.mxu0 %v633
    %1731 = vmatprep.subr.mxu0 0.0
    %1732 = vmatpush1.msra.mxu0 %v634
    %1733 = vmatprep.subr.mxu0 0.0
    %1734 = vmatpush1.msra.mxu0 %v635
    %1735 = vmatprep.subr.mxu0 0.0
    %1736 = vmatpush1.msra.mxu0 %v636
    %1737 = vmatprep.subr.mxu0 0.0
    %1738 = vmatpush1.msra.mxu0 %v637
    %1739 = vmatprep.subr.mxu0 0.0
    %1740 = vmatpush1.msra.mxu0 %v638
    %1741 = vmatprep.subr.mxu0 0.0
    %1742 = vmatpush1.msra.mxu0 %v639
    %1743 = vmatprep.subr.mxu0 0.0
    %1744 = vmatpush1.msra.mxu0 %v640
    %1745 = vmatprep.subr.mxu0 0.0
    %1746 = vmatpush1.msra.mxu0 %v641
    %1747 = vmatprep.subr.mxu0 0.0
    %1748 = vmatpush1.msra.mxu0 %v642
    %1749 = vmatprep.subr.mxu0 0.0
    %1750 = vmatpush1.msra.mxu0 %v643
    %1751 = vmatprep.subr.mxu0 0.0
    %1752 = vmatpush1.msra.mxu0 %v644
    %1753 = vmatprep.subr.mxu0 0.0
    %1754 = vmatpush1.msra.mxu0 %v645
    %1755 = vmatprep.subr.mxu0 0.0
    %1756 = vmatpush1.msra.mxu0 %v646
    %1757 = vmatprep.subr.mxu0 0.0
    %1758 = vmatpush1.msra.mxu0 %v647
    %1759 = vmatprep.subr.mxu0 0.0
    %1760 = vmatpush1.msra.mxu0 %v648
    %1761 = vmatprep.subr.mxu0 0.0
    %1762 = vmatpush1.msra.mxu0 %v649
    %1763 = vmatprep.subr.mxu0 0.0
    %1764 = vmatpush1.msra.mxu0 %v650
    %1765 = vmatprep.subr.mxu0 0.0
    %1766 = vmatpush1.msra.mxu0 %v651
    %1767 = vmatprep.subr.mxu0 0.0
    %1768 = vmatpush1.msra.mxu0 %v652
    %1769 = vmatprep.subr.mxu0 0.0
    %1770 = vmatpush1.msra.mxu0 %v653
    %1771 = vmatprep.subr.mxu0 0.0
    %1772 = vmatpush1.msra.mxu0 %v654
    %1773 = vmatprep.subr.mxu0 0.0
    %1774 = vmatpush1.msra.mxu0 %v655
    %1775 = vmatprep.subr.mxu0 0.0
    %1776 = vmatpush1.msra.mxu0 %v656
    %1777 = vmatprep.subr.mxu0 0.0
    %1778 = vmatpush1.msra.mxu0 %v657
    %1779 = vmatprep.mubr.f32.mxu0 %v145
    %1780 = vmatmul.mubr.f32.gmra.mrb[0].mxu0 %v144
    %v1781 = vpop.f32.mrb[0].mxu0
    %v1782 = vadd.f32 %v1712, %v1781
    %v1783 = vpop.f32.mrb[0].mxu0
    %1784 = vdwg.mxu0
    %v1785 = vmax.f32 %v1782, 0.0
    %v1786 = vld [vmem:[#allocation8] sm:$0xff]
    %v1787 = vld [vmem:[#allocation8 + $0x8] sm:$0xff]
    %v1788 = vld [vmem:[#allocation8 + $0x10] sm:$0xff]
    %v1789 = vld [vmem:[#allocation8 + $0x18] sm:$0xff]
    %v1790 = vld [vmem:[#allocation8 + $0x20] sm:$0xff]
    %v1791 = vld [vmem:[#allocation8 + $0x28] sm:$0xff]
    %v1792 = vld [vmem:[#allocation8 + $0x30] sm:$0xff]
    %v1793 = vld [vmem:[#allocation8 + $0x38] sm:$0xff]
    %v1794 = vld [vmem:[#allocation8 + $0x40] sm:$0xff]
    %v1795 = vld [vmem:[#allocation8 + $0x48] sm:$0xff]
    %v1796 = vld [vmem:[#allocation8 + $0x50] sm:$0xff]
    %v1797 = vld [vmem:[#allocation8 + $0x58] sm:$0xff]
    %v1798 = vld [vmem:[#allocation8 + $0x60] sm:$0xff]
    %v1799 = vld [vmem:[#allocation8 + $0x68] sm:$0xff]
    %v1800 = vld [vmem:[#allocation8 + $0x70] sm:$0xff]
    %v1801 = vld [vmem:[#allocation8 + $0x78] sm:$0xff]
    %v1802 = vld [vmem:[#allocation10] sm:$0x1]
    %v1804 = vlaneseq
    %v1805 = vshrl.u32 %v1804, 7
    %v1806 = vsub.s32 0, %v1805
    %v1807 = vrot.slane %v1802, %v1806
    %1809 = vmatprep.subr.mxu0 0.0
    %1810 = vmatpush1.msra.mxu0 %v1786
    %1811 = vmatprep.subr.mxu0 0.0
    %1812 = vmatpush1.msra.mxu0 %v1787
    %1813 = vmatprep.subr.mxu0 0.0
    %1814 = vmatpush1.msra.mxu0 %v1788
    %1815 = vmatprep.subr.mxu0 0.0
    %1816 = vmatpush1.msra.mxu0 %v1789
    %1817 = vmatprep.subr.mxu0 0.0
    %1818 = vmatpush1.msra.mxu0 %v1790
    %1819 = vmatprep.subr.mxu0 0.0
    %1820 = vmatpush1.msra.mxu0 %v1791
    %1821 = vmatprep.subr.mxu0 0.0
    %1822 = vmatpush1.msra.mxu0 %v1792
    %1823 = vmatprep.subr.mxu0 0.0
    %1824 = vmatpush1.msra.mxu0 %v1793
    %1825 = vmatprep.subr.mxu0 0.0
    %1826 = vmatpush1.msra.mxu0 %v1794
    %1827 = vmatprep.subr.mxu0 0.0
    %1828 = vmatpush1.msra.mxu0 %v1795
    %1829 = vmatprep.subr.mxu0 0.0
    %1830 = vmatpush1.msra.mxu0 %v1796
    %1831 = vmatprep.subr.mxu0 0.0
    %1832 = vmatpush1.msra.mxu0 %v1797
    %1833 = vmatprep.subr.mxu0 0.0
    %1834 = vmatpush1.msra.mxu0 %v1798
    %1835 = vmatprep.subr.mxu0 0.0
    %1836 = vmatpush1.msra.mxu0 %v1799
    %1837 = vmatprep.subr.mxu0 0.0
    %1838 = vmatpush1.msra.mxu0 %v1800
    %1839 = vmatprep.subr.mxu0 0.0
    %1840 = vmatpush1.msra.mxu0 %v1801
    %1841 = vmatprep.subr.mxu0 0.0
    %1842 = vmatpush1.msra.mxu0 0.0
    %1843 = vmatprep.subr.mxu0 0.0
    %1844 = vmatpush1.msra.mxu0 0.0
    %1845 = vmatprep.subr.mxu0 0.0
    %1846 = vmatpush1.msra.mxu0 0.0
    %1847 = vmatprep.subr.mxu0 0.0
    %1848 = vmatpush1.msra.mxu0 0.0
    %1849 = vmatprep.subr.mxu0 0.0
    %1850 = vmatpush1.msra.mxu0 0.0
    %1851 = vmatprep.subr.mxu0 0.0
    %1852 = vmatpush1.msra.mxu0 0.0
    %1853 = vmatprep.subr.mxu0 0.0
    %1854 = vmatpush1.msra.mxu0 0.0
    %1855 = vmatprep.subr.mxu0 0.0
    %1856 = vmatpush1.msra.mxu0 0.0
    %1857 = vmatprep.subr.mxu0 0.0
    %1858 = vmatpush1.msra.mxu0 0.0
    %1859 = vmatprep.subr.mxu0 0.0
    %1860 = vmatpush1.msra.mxu0 0.0
    %1861 = vmatprep.subr.mxu0 0.0
    %1862 = vmatpush1.msra.mxu0 0.0
    %1863 = vmatprep.subr.mxu0 0.0
    %1864 = vmatpush1.msra.mxu0 0.0
    %1865 = vmatprep.subr.mxu0 0.0
    %1866 = vmatpush1.msra.mxu0 0.0
    %1867 = vmatprep.subr.mxu0 0.0
    %1868 = vmatpush1.msra.mxu0 0.0
    %1869 = vmatprep.subr.mxu0 0.0
    %1870 = vmatpush1.msra.mxu0 0.0
    %1871 = vmatprep.subr.mxu0 0.0
    %1872 = vmatpush1.msra.mxu0 0.0
    %1873 = vmatprep.mubr.f32.mxu0 0.0
    %1874 = vmatmul.mubr.f32.gmra.mrb[0].mxu0 %v1785
    %v1875 = vpop.f32.mrb[0].mxu0
    %v1876 = vadd.f32 %v1807, %v1875
    %v1877 = vpop.f32.mrb[0].mxu0
    %1878 = vdwg.mxu0
    %v1879 = vmax.f32 %v1876, 0.0
    %v1880 = vld [vmem:[#allocation11] sm:$0xff]
    %v1881 = vld [vmem:[#allocation11 + $0x8] sm:$0xff]
    %v1882 = vld [vmem:[#allocation11 + $0x10] sm:$0xff]
    %v1883 = vld [vmem:[#allocation11 + $0x18] sm:$0xff]
    %v1884 = vld [vmem:[#allocation11 + $0x20] sm:$0xff]
    %v1885 = vld [vmem:[#allocation11 + $0x28] sm:$0xff]
    %v1886 = vld [vmem:[#allocation11 + $0x30] sm:$0xff]
    %v1887 = vld [vmem:[#allocation11 + $0x38] sm:$0xff]
    %v1888 = vld [vmem:[#allocation11 + $0x40] sm:$0xff]
    %v1889 = vld [vmem:[#allocation11 + $0x48] sm:$0xff]
    %v1890 = vld [vmem:[#allocation11 + $0x50] sm:$0xff]
    %v1891 = vld [vmem:[#allocation11 + $0x58] sm:$0xff]
    %v1892 = vld [vmem:[#allocation11 + $0x60] sm:$0xff]
    %v1893 = vld [vmem:[#allocation11 + $0x68] sm:$0xff]
    %v1894 = vld [vmem:[#allocation11 + $0x70] sm:$0xff]
    %v1895 = vld [vmem:[#allocation11 + $0x78] sm:$0xff]
    %v1896 = vld [vmem:[#allocation13] sm:$0x1]
    %v1898 = vlaneseq
    %v1899 = vshrl.u32 %v1898, 7
    %v1900 = vsub.s32 0, %v1899
    %v1901 = vrot.slane %v1896, %v1900
    %1903 = vmatprep.subr.mxu0 0.0
    %1904 = vmatpush1.msra.mxu0 %v1880
    %1905 = vmatprep.subr.mxu0 0.0
    %1906 = vmatpush1.msra.mxu0 %v1881
    %1907 = vmatprep.subr.mxu0 0.0
    %1908 = vmatpush1.msra.mxu0 %v1882
    %1909 = vmatprep.subr.mxu0 0.0
    %1910 = vmatpush1.msra.mxu0 %v1883
    %1911 = vmatprep.subr.mxu0 0.0
    %1912 = vmatpush1.msra.mxu0 %v1884
    %1913 = vmatprep.subr.mxu0 0.0
    %1914 = vmatpush1.msra.mxu0 %v1885
    %1915 = vmatprep.subr.mxu0 0.0
    %1916 = vmatpush1.msra.mxu0 %v1886
    %1917 = vmatprep.subr.mxu0 0.0
    %1918 = vmatpush1.msra.mxu0 %v1887
    %1919 = vmatprep.subr.mxu0 0.0
    %1920 = vmatpush1.msra.mxu0 %v1888
    %1921 = vmatprep.subr.mxu0 0.0
    %1922 = vmatpush1.msra.mxu0 %v1889
    %1923 = vmatprep.subr.mxu0 0.0
    %1924 = vmatpush1.msra.mxu0 %v1890
    %1925 = vmatprep.subr.mxu0 0.0
    %1926 = vmatpush1.msra.mxu0 %v1891
    %1927 = vmatprep.subr.mxu0 0.0
    %1928 = vmatpush1.msra.mxu0 %v1892
    %1929 = vmatprep.subr.mxu0 0.0
    %1930 = vmatpush1.msra.mxu0 %v1893
    %1931 = vmatprep.subr.mxu0 0.0
    %1932 = vmatpush1.msra.mxu0 %v1894
    %1933 = vmatprep.subr.mxu0 0.0
    %1934 = vmatpush1.msra.mxu0 %v1895
    %1935 = vmatprep.subr.mxu0 0.0
    %1936 = vmatpush1.msra.mxu0 0.0
    %1937 = vmatprep.subr.mxu0 0.0
    %1938 = vmatpush1.msra.mxu0 0.0
    %1939 = vmatprep.subr.mxu0 0.0
    %1940 = vmatpush1.msra.mxu0 0.0
    %1941 = vmatprep.subr.mxu0 0.0
    %1942 = vmatpush1.msra.mxu0 0.0
    %1943 = vmatprep.subr.mxu0 0.0
    %1944 = vmatpush1.msra.mxu0 0.0
    %1945 = vmatprep.subr.mxu0 0.0
    %1946 = vmatpush1.msra.mxu0 0.0
    %1947 = vmatprep.subr.mxu0 0.0
    %1948 = vmatpush1.msra.mxu0 0.0
    %1949 = vmatprep.subr.mxu0 0.0
    %1950 = vmatpush1.msra.mxu0 0.0
    %1951 = vmatprep.subr.mxu0 0.0
    %1952 = vmatpush1.msra.mxu0 0.0
    %1953 = vmatprep.subr.mxu0 0.0
    %1954 = vmatpush1.msra.mxu0 0.0
    %1955 = vmatprep.subr.mxu0 0.0
    %1956 = vmatpush1.msra.mxu0 0.0
    %1957 = vmatprep.subr.mxu0 0.0
    %1958 = vmatpush1.msra.mxu0 0.0
    %1959 = vmatprep.subr.mxu0 0.0
    %1960 = vmatpush1.msra.mxu0 0.0
    %1961 = vmatprep.subr.mxu0 0.0
    %1962 = vmatpush1.msra.mxu0 0.0
    %1963 = vmatprep.subr.mxu0 0.0
    %1964 = vmatpush1.msra.mxu0 0.0
    %1965 = vmatprep.subr.mxu0 0.0
    %1966 = vmatpush1.msra.mxu0 0.0
    %1967 = vmatprep.mubr.f32.mxu0 0.0
    %1968 = vmatmul.mubr.f32.gmra.mrb[0].mxu0 %v1879
    %v1969 = vpop.f32.mrb[0].mxu0
    %v1970 = vadd.f32 %v1901, %v1969
    %v1971 = vpop.f32.mrb[0].mxu0
    %1972 = vdwg.mxu0
    %1973 = vst [vmem:[#allocation14] sm:$0xff] %v1970
    // Predicated region
    $region58: #{tpu_custom_call.1} parent=1 // pred_check
      _
    $region59: #{tpu_custom_call.1} parent=1 // pred_check_branch
      %1975 = sbr.rel (0) target = $region61
    $region60: #{tpu_custom_call.1} parent=1 // pred_region
      %s1977 = ssub.s32 128, 128
      %1978 = vsyncadd [#allocation4], %s1977
      %s1980 = sshll.u32 [#allocation14], 4
      %s1981 = int_to_ptr.vmem [resolvable:$true] %s1980
      %1983 = dma.vmem_to_hbm [thread:$0]  %s1981, 128, %s7, [#allocation4]
    $region61: #{tpu_custom_call.1} parent=1 // pred_fallthru
      _
    // Predicated region
    $region62: #{tpu_custom_call.1} parent=1 // pred_check
      _
    $region63: #{tpu_custom_call.1} parent=1 // pred_check_branch
      %1985 = sbr.rel (0) target = $region65
    $region64: #{tpu_custom_call.1} parent=1 // pred_region
      %1986 = dma.done [#allocation4], 128
    $region65: #{tpu_custom_call.1} parent=1 // pred_fallthru
      _
    %1987 = vsyncpa [#allocation3], 1
    %1988 = vsyncpa [#allocation6], 1
    %1989 = vsyncpa [#allocation9], 1
    %1990 = vsyncpa [#allocation12], 1
    %1991 = vsyncpa [#allocation4], 1

</llo_original>
